<compile_context>
chip_gen: v5e
topology: v5e:2x2
jax: 0.10.0
libtpu: 0.0.40
codegen_flags: <defaults>
</compile_context>

<pallas_src>
import functools

import jax
import jax.numpy as jnp
import numpy as np
from jax import lax
from jax.experimental import pallas as pl
from jax.experimental.pallas import tpu as pltpu

_NEG_INF = -1e30


def _self_attn_kernel(q_ref, x_ref, k_ref, v_ref, gamma_ref, o_ref,
                      m_sc, l_sc, acc_sc, *, n_real, n_padded, tkv, bf16_exp):
    ki = pl.program_id(2)

    # Init online-softmax state on the first kv tile of this query tile.
    @pl.when(ki == 0)
    def _init():
        m_sc[...] = jnp.full_like(m_sc, _NEG_INF)
        l_sc[...] = jnp.zeros_like(l_sc)
        acc_sc[...] = jnp.zeros_like(acc_sc)

    q = q_ref[0]          # (Cqp, tq)  bf16
    k = k_ref[0]          # (Cqp, tkv) bf16
    v = v_ref[0]          # (C,   tkv) bf16

    # energy^T[j, i] = k_j . q_i  (contract the zero-padded Cq axis; the zero
    # rows contribute nothing).  No explicit transpose is materialized.
    e_t = lax.dot_general(k, q, (((0,), (0,)), ((), ())),
                          preferred_element_type=jnp.float32)        # (tkv, tq)

    if n_padded != n_real:
        # Mask keys that only exist because N was padded to a lane multiple.
        key_idx = ki * tkv + lax.broadcasted_iota(jnp.int32, e_t.shape, 0)
        e_t = jnp.where(key_idx < n_real, e_t, _NEG_INF)

    # Online softmax along the key axis; statistics stay (1, tq) f32.
    m_prev = m_sc[...]
    m_new = jnp.maximum(m_prev, jnp.max(e_t, axis=0, keepdims=True))  # (1, tq)
    alpha = jnp.exp(m_prev - m_new)

    if bf16_exp:
        # Subtract in f32, exp in bf16 (EUP bf16 path on v6e/v7x); feed the
        # bf16 probabilities straight to the PV matmul.  The running sum l
        # still accumulates in f32.
        p_t = jnp.exp((e_t - m_new).astype(jnp.bfloat16))             # (tkv, tq)
        p_sum = jnp.sum(p_t, axis=0, keepdims=True, dtype=jnp.float32)
    else:
        p_f = jnp.exp(e_t - m_new)                                    # f32
        p_sum = jnp.sum(p_f, axis=0, keepdims=True)
        p_t = p_f.astype(jnp.bfloat16)

    l_sc[...] = alpha * l_sc[...] + p_sum
    acc_sc[...] = alpha * acc_sc[...] + lax.dot_general(
        v, p_t, (((1,), (0,)), ((), ())),
        preferred_element_type=jnp.float32)                           # (C, tq)
    m_sc[...] = m_new

    # Last kv tile: normalize, apply gamma, add the exact f32 residual.
    @pl.when(ki == pl.num_programs(2) - 1)
    def _finish():
        inv_l = pl.reciprocal(l_sc[...], approx=False)                # (1, tq)
        out = gamma_ref[0, 0] * (acc_sc[...] * inv_l) + x_ref[0]
        o_ref[0] = out.astype(o_ref.dtype)


def _vmem_capacity_bytes():
    try:
        info = pltpu.get_tpu_info()
        cap = getattr(info, "vmem_capacity_bytes", None)
        if cap:
            return int(cap)
    except Exception:
        pass
    return 64 * 1024 * 1024   # conservative (v7x per-TC VMEM)


def _device_kind():
    try:
        return jax.devices()[0].device_kind.lower()
    except Exception:
        return ""


def _use_bf16_exp():
    # bf16 EUP path exists on v6e / v7x; keep f32 exp on v5e and unknown chips.
    kind = _device_kind()
    return any(tag in kind for tag in ("v6", "v7", "7x"))


def _is_multicore_chip():
    # v7x has 2 TensorCores sharded over the "parallel" grid axes.
    kind = _device_kind()
    return ("7x" in kind) or ("v7" in kind)


def _pick_tq(np_, batch, c, cqp, tkv, vmem_budget, want_parallel):
    """Largest MXU-friendly query tile that divides the padded N, fits the
    per-step VMEM budget and leaves enough parallel grid steps for megacore."""
    candidates = [t for t in (2048, 1024, 512, 256, 128) if t <= np_ and np_ % t == 0]
    if not candidates:
        return np_

    def est_vmem(tq):
        return (2 * cqp * tq * 2       # q    (bf16, double-buffered)
                + 2 * c * tq * 4       # x    (f32 residual, double-buffered)
                + 2 * cqp * tkv * 2    # k    (bf16)
                + 2 * c * tkv * 2      # v    (bf16)
                + 2 * c * tq * 4       # out  (f32, double-buffered)
                + c * tq * 4           # acc scratch
                + 2 * tq * 4           # m / l scratch
                + 2 * tq * tkv * 4)    # e_t / p_t temporaries

    for tq in candidates:
        if est_vmem(tq) > vmem_budget:
            continue
        if batch * (np_ // tq) < want_parallel and tq > candidates[-1]:
            continue
        return tq
    return candidates[-1]


def self_attn_pallas(x_nchw, wq, wk, wv, bq, bk, bv, gamma, *, tq=None, tkv=None):
    """SAGAN self-attention forward.

    x_nchw: (B, C, W, H) f32.
    wq, wk: (C//8, C) 1x1-conv weights in (out, in) layout (== torch weight[:, :, 0, 0]);
    wv: (C, C); bq, bk: (C//8,); bv: (C,); gamma: (1,).
    """
    B, C, W, H = x_nchw.shape
    N = W * H
    Cq = wq.shape[0]
    f32, bf16 = jnp.float32, jnp.bfloat16

    x_cn = x_nchw.reshape(B, C, N).astype(f32)   # free reshape: N on the lane axis

    # 1x1 convs == channel matmuls; done ONCE here (not re-projected per kv tile).
    q = jnp.einsum('oc,bcn->bon', wq, x_cn) + bq[None, :, None]   # (B, Cq, N)
    k = jnp.einsum('oc,bcn->bon', wk, x_cn) + bk[None, :, None]   # (B, Cq, N)
    v = jnp.einsum('oc,bcn->bon', wv, x_cn) + bv[None, :, None]   # (B, C,  N)

    # Pad Cq to the bf16 sublane granule (zero rows contribute nothing to QK^T)
    # and N to a lane-dense multiple of 128 (padded keys are masked in-kernel).
    Cqp = max(16, ((Cq + 15) // 16) * 16)
    Np = ((N + 127) // 128) * 128

    def pad_to(a, rows, cols):
        r_pad, c_pad = rows - a.shape[1], cols - a.shape[2]
        if r_pad or c_pad:
            a = jnp.pad(a, ((0, 0), (0, r_pad), (0, c_pad)))
        return a

    q_b = pad_to(q, Cqp, Np).astype(bf16)
    k_b = pad_to(k, Cqp, Np).astype(bf16)
    v_b = pad_to(v, C, Np).astype(bf16)
    x_p = pad_to(x_cn, C, Np)                    # f32, residual only
    gamma_2 = gamma.reshape(1, 1).astype(f32)

    # Generation-aware VMEM budget (v7x has 64 MiB/TC; v5e/v6e have 128 MiB).
    vmem_cap = _vmem_capacity_bytes()
    vmem_limit = min(int(vmem_cap * 0.6), 96 * 1024 * 1024)

    if tkv is None:
        tkv = 256 if (Np >= 256 and Np % 256 == 0) else min(128, Np)
    if tq is None:
        want_parallel = 2 if _is_multicore_chip() else 1
        tq = _pick_tq(Np, B, C, Cqp, tkv, int(vmem_limit * 0.8), want_parallel)
    assert Np % tq == 0 and Np % tkv == 0, (Np, tq, tkv)

    grid = (B, Np // tq, Np // tkv)

    kernel = functools.partial(_self_attn_kernel, n_real=N, n_padded=Np,
                               tkv=tkv, bf16_exp=_use_bf16_exp())

    out_cn = pl.pallas_call(
        kernel,
        out_shape=jax.ShapeDtypeStruct((B, C, Np), f32),
        grid_spec=pltpu.PrefetchScalarGridSpec(
            num_scalar_prefetch=0,
            grid=grid,
            in_specs=[
                pl.BlockSpec((1, Cqp, tq), lambda b, qi, ki: (b, 0, qi)),   # q tile
                pl.BlockSpec((1, C, tq), lambda b, qi, ki: (b, 0, qi)),     # x (residual)
                pl.BlockSpec((1, Cqp, tkv), lambda b, qi, ki: (b, 0, ki)),  # k tile
                pl.BlockSpec((1, C, tkv), lambda b, qi, ki: (b, 0, ki)),    # v tile
                pl.BlockSpec(memory_space=pltpu.MemorySpace.SMEM),          # gamma (1,1)
            ],
            out_specs=pl.BlockSpec((1, C, tq), lambda b, qi, ki: (b, 0, qi)),
            scratch_shapes=[
                pltpu.VMEM((1, tq), f32),       # running max
                pltpu.VMEM((1, tq), f32),       # running sum
                pltpu.VMEM((C, tq), f32),       # output accumulator
            ],
        ),
        compiler_params=pltpu.CompilerParams(
            dimension_semantics=("parallel", "parallel", "arbitrary"),
            vmem_limit_bytes=vmem_limit),
    )(q_b, x_p, k_b, v_b, gamma_2)

    if Np != N:
        out_cn = out_cn[:, :, :N]
    return out_cn.reshape(B, C, W, H)


def self_attn_reference(x_nchw, wq, wk, wv, bq, bk, bv, gamma):
    """Pure-JAX f32 reference mirroring the PyTorch forward exactly."""
    B, C, W, H = x_nchw.shape
    N = W * H
    x_flat = x_nchw.reshape(B, C, N)                                   # (B, C, N)
    q = jnp.einsum('oc,bcn->bon', wq, x_flat) + bq[None, :, None]      # (B, Cq, N)
    k = jnp.einsum('oc,bcn->bon', wk, x_flat) + bk[None, :, None]      # (B, Cq, N)
    v = jnp.einsum('oc,bcn->bon', wv, x_flat) + bv[None, :, None]      # (B, C, N)
    proj_query = jnp.transpose(q, (0, 2, 1))                           # (B, N, Cq)
    energy = jnp.einsum('bik,bkj->bij', proj_query, k)                 # (B, N, N)
    attention = jax.nn.softmax(energy, axis=-1)
    out = jnp.einsum('bcn,bin->bci', v, attention)                     # (B, C, N)
    return gamma[0] * out.reshape(B, C, W, H) + x_nchw


if __name__ == "__main__":
    key = jax.random.PRNGKey(0)

    def make_case(case_key, B, C, W, H):
        Cq = max(1, C // 8)
        ks = jax.random.split(case_key, 7)
        x = jax.random.normal(ks[0], (B, C, W, H), dtype=jnp.float32)
        # Conv2d 1x1 weights in (out, in) layout (== torch weight[:, :, 0, 0]).
        wq = 0.1 * jax.random.normal(ks[1], (Cq, C), dtype=jnp.float32)
        wk = 0.1 * jax.random.normal(ks[2], (Cq, C), dtype=jnp.float32)
        wv = 0.1 * jax.random.normal(ks[3], (C, C), dtype=jnp.float32)
        bq = 0.1 * jax.random.normal(ks[4], (Cq,), dtype=jnp.float32)
        bk = 0.1 * jax.random.normal(ks[5], (Cq,), dtype=jnp.float32)
        bv = 0.1 * jax.random.normal(ks[6], (C,), dtype=jnp.float32)
        # The module initializes gamma to 0 (output == x); use a nonzero value
        # so the attention path is actually exercised in this synthetic test.
        gamma = jnp.array([0.5], dtype=jnp.float32)
        return x, wq, wk, wv, bq, bk, bv, gamma

    k1, k2 = jax.random.split(key)

    # Case 1: B=2, C=32, 16x16 (N = 256).  Auto tiles, then forced 128 tiles so
    # the multi-kv-tile online-softmax accumulation path is exercised too.
    args1 = make_case(k1, 2, 32, 16, 16)
    ref1 = self_attn_reference(*args1)
    out1 = jax.block_until_ready(self_attn_pallas(*args1))
    np.testing.assert_allclose(np.asarray(out1), np.asarray(ref1),
                               rtol=2e-2, atol=2e-2)
    out1b = jax.block_until_ready(self_attn_pallas(*args1, tq=128, tkv=128))
    np.testing.assert_allclose(np.asarray(out1b), np.asarray(ref1),
                               rtol=2e-2, atol=2e-2)

    # Case 2: non-128-multiple spatial extent (N = 100 -> padded to 128 with
    # masked keys), exercising the padding/masking path.
    args2 = make_case(k2, 1, 16, 10, 10)
    ref2 = self_attn_reference(*args2)
    out2 = jax.block_until_ready(self_attn_pallas(*args2))
    np.testing.assert_allclose(np.asarray(out2), np.asarray(ref2),
                               rtol=2e-2, atol=2e-2)

    print("KERNEL_OK")
</pallas_src>

<mosaic_0001>
module attributes {stable_mosaic.version = 11 : i64} {
  func.func @_self_attn_kernel(%arg0: i32, %arg1: i32, %arg2: i32, %arg3: memref<1x16x256xbf16, #tpu.memory_space<vmem>>, %arg4: memref<1x32x256xf32, #tpu.memory_space<vmem>>, %arg5: memref<1x16x256xbf16, #tpu.memory_space<vmem>>, %arg6: memref<1x32x256xbf16, #tpu.memory_space<vmem>>, %arg7: memref<1x1xf32, #tpu.memory_space<smem>>, %arg8: memref<1x32x256xf32, #tpu.memory_space<vmem>>, %arg9: memref<1x256xf32, #tpu.memory_space<vmem>>, %arg10: memref<1x256xf32, #tpu.memory_space<vmem>>, %arg11: memref<32x256xf32, #tpu.memory_space<vmem>>) attributes {dimension_semantics = [#tpu.dimension_semantics<parallel>, #tpu.dimension_semantics<parallel>, #tpu.dimension_semantics<arbitrary>], iteration_bounds = array<i64: 2, 1, 1>, scalar_prefetch = 0 : i64, scratch_operands = 3 : i64, tpu.core_type = #tpu.core_type<tc>, window_params = [{transform_indices = @transform_0, window_bounds = array<i64: 1, 16, 256>}, {transform_indices = @transform_1, window_bounds = array<i64: 1, 32, 256>}, {transform_indices = @transform_2, window_bounds = array<i64: 1, 16, 256>}, {transform_indices = @transform_3, window_bounds = array<i64: 1, 32, 256>}, {transform_indices = @transform_4, window_bounds = array<i64: 1, 1>}, {transform_indices = @transform_5, window_bounds = array<i64: 1, 32, 256>}]} {
    %c0_i32 = arith.constant 0 : i32
    %0 = arith.cmpi eq, %arg2, %c0_i32 : i32
    %1 = arith.extui %0 : i1 to i32
    %c0_i32_0 = arith.constant 0 : i32
    %2 = arith.cmpi ne, %1, %c0_i32_0 : i32
    scf.if %2 {
      %cst_26 = arith.constant -1.000000e+30 : f32
      %36 = vector.broadcast %cst_26 : f32 to vector<1x256xf32>
      %c0_27 = arith.constant 0 : index
      %c0_28 = arith.constant 0 : index
      %37 = vector.load %arg9[%c0_27, %c0_28] : memref<1x256xf32, #tpu.memory_space<vmem>>, vector<1x256xf32>
      tpu.vector_store %arg9[%c0_27, %c0_28], %36 {strides = array<i32>} : memref<1x256xf32, #tpu.memory_space<vmem>>, vector<1x256xf32>,
      %cst_29 = arith.constant 0.000000e+00 : f32
      %38 = vector.broadcast %cst_29 : f32 to vector<1x256xf32>
      %c0_30 = arith.constant 0 : index
      %c0_31 = arith.constant 0 : index
      %39 = vector.load %arg10[%c0_30, %c0_31] : memref<1x256xf32, #tpu.memory_space<vmem>>, vector<1x256xf32>
      tpu.vector_store %arg10[%c0_30, %c0_31], %38 {strides = array<i32>} : memref<1x256xf32, #tpu.memory_space<vmem>>, vector<1x256xf32>,
      %cst_32 = arith.constant 0.000000e+00 : f32
      %40 = vector.broadcast %cst_32 : f32 to vector<32x256xf32>
      %c0_33 = arith.constant 0 : index
      %c0_34 = arith.constant 0 : index
      %41 = vector.load %arg11[%c0_33, %c0_34] : memref<32x256xf32, #tpu.memory_space<vmem>>, vector<32x256xf32>
      tpu.vector_store %arg11[%c0_33, %c0_34], %40 {strides = array<i32>} : memref<32x256xf32, #tpu.memory_space<vmem>>, vector<32x256xf32>,
    } else {
    }
    %c0 = arith.constant 0 : index
    %c0_1 = arith.constant 0 : index
    %c0_2 = arith.constant 0 : index
    %3 = vector.load %arg3[%c0, %c0_1, %c0_2] : memref<1x16x256xbf16, #tpu.memory_space<vmem>>, vector<1x16x256xbf16>
    %4 = vector.shape_cast %3 : vector<1x16x256xbf16> to vector<16x256xbf16>
    %c0_3 = arith.constant 0 : index
    %c0_4 = arith.constant 0 : index
    %c0_5 = arith.constant 0 : index
    %5 = vector.load %arg5[%c0_3, %c0_4, %c0_5] : memref<1x16x256xbf16, #tpu.memory_space<vmem>>, vector<1x16x256xbf16>
    %6 = vector.shape_cast %5 : vector<1x16x256xbf16> to vector<16x256xbf16>
    %c0_6 = arith.constant 0 : index
    %c0_7 = arith.constant 0 : index
    %c0_8 = arith.constant 0 : index
    %7 = vector.load %arg6[%c0_6, %c0_7, %c0_8] : memref<1x32x256xbf16, #tpu.memory_space<vmem>>, vector<1x32x256xbf16>
    %8 = vector.shape_cast %7 : vector<1x32x256xbf16> to vector<32x256xbf16>
    %cst = arith.constant dense<0.000000e+00> : vector<256x256xf32>
    %9 = tpu.matmul %6, %4, %cst {dimension_numbers = #tpu.dot_dimension_numbers<[0], [0], [1], [1], [0, 1, 1, 1], [], []>} : vector<16x256xbf16>, vector<16x256xbf16>, vector<256x256xf32> -> vector<256x256xf32>
    %c0_9 = arith.constant 0 : index
    %c0_10 = arith.constant 0 : index
    %10 = vector.load %arg9[%c0_9, %c0_10] : memref<1x256xf32, #tpu.memory_space<vmem>>, vector<1x256xf32>
    %cst_11 = arith.constant dense<0xFF800000> : vector<256xf32>
    %11 = vector.multi_reduction <maximumf>, %9, %cst_11 [0] : vector<256x256xf32> to vector<256xf32>
    %12 = vector.shape_cast %11 : vector<256xf32> to vector<1x256xf32>
    %13 = arith.maximumf %10, %12 : vector<1x256xf32>
    %14 = arith.subf %10, %13 : vector<1x256xf32>
    %15 = math.exp %14 : vector<1x256xf32>
    %16 = vector.broadcast %13 : vector<1x256xf32> to vector<256x256xf32>
    %17 = arith.subf %9, %16 : vector<256x256xf32>
    %18 = math.exp %17 : vector<256x256xf32>
    %cst_12 = arith.constant dense<0.000000e+00> : vector<256xf32>
    %19 = vector.multi_reduction <add>, %18, %cst_12 [0] : vector<256x256xf32> to vector<256xf32>
    %20 = vector.shape_cast %19 : vector<256xf32> to vector<1x256xf32>
    %21 = arith.truncf %18 : vector<256x256xf32> to vector<256x256xbf16>
    %c0_13 = arith.constant 0 : index
    %c0_14 = arith.constant 0 : index
    %22 = vector.load %arg10[%c0_13, %c0_14] : memref<1x256xf32, #tpu.memory_space<vmem>>, vector<1x256xf32>
    %23 = arith.mulf %15, %22 : vector<1x256xf32>
    %24 = arith.addf %23, %20 : vector<1x256xf32>
    %c0_15 = arith.constant 0 : index
    %c0_16 = arith.constant 0 : index
    %25 = vector.load %arg10[%c0_15, %c0_16] : memref<1x256xf32, #tpu.memory_space<vmem>>, vector<1x256xf32>
    tpu.vector_store %arg10[%c0_15, %c0_16], %24 {strides = array<i32>} : memref<1x256xf32, #tpu.memory_space<vmem>>, vector<1x256xf32>,
    %c0_17 = arith.constant 0 : index
    %c0_18 = arith.constant 0 : index
    %26 = vector.load %arg11[%c0_17, %c0_18] : memref<32x256xf32, #tpu.memory_space<vmem>>, vector<32x256xf32>
    %27 = vector.broadcast %15 : vector<1x256xf32> to vector<32x256xf32>
    %28 = arith.mulf %27, %26 : vector<32x256xf32>
    %cst_19 = arith.constant dense<0.000000e+00> : vector<32x256xf32>
    %29 = tpu.matmul %8, %21, %cst_19 {dimension_numbers = #tpu.dot_dimension_numbers<[1], [0], [0], [1], [0, 0, 1, 1], [], []>} : vector<32x256xbf16>, vector<256x256xbf16>, vector<32x256xf32> -> vector<32x256xf32>
    %30 = arith.addf %28, %29 : vector<32x256xf32>
    %c0_20 = arith.constant 0 : index
    %c0_21 = arith.constant 0 : index
    %31 = vector.load %arg11[%c0_20, %c0_21] : memref<32x256xf32, #tpu.memory_space<vmem>>, vector<32x256xf32>
    tpu.vector_store %arg11[%c0_20, %c0_21], %30 {strides = array<i32>} : memref<32x256xf32, #tpu.memory_space<vmem>>, vector<32x256xf32>,
    %c0_22 = arith.constant 0 : index
    %c0_23 = arith.constant 0 : index
    %32 = vector.load %arg9[%c0_22, %c0_23] : memref<1x256xf32, #tpu.memory_space<vmem>>, vector<1x256xf32>
    tpu.vector_store %arg9[%c0_22, %c0_23], %13 {strides = array<i32>} : memref<1x256xf32, #tpu.memory_space<vmem>>, vector<1x256xf32>,
    %c0_i32_24 = arith.constant 0 : i32
    %33 = arith.cmpi eq, %arg2, %c0_i32_24 : i32
    %34 = arith.extui %33 : i1 to i32
    %c0_i32_25 = arith.constant 0 : i32
    %35 = arith.cmpi ne, %34, %c0_i32_25 : i32
    scf.if %35 {
      %c0_26 = arith.constant 0 : index
      %c0_27 = arith.constant 0 : index
      %36 = vector.load %arg10[%c0_26, %c0_27] : memref<1x256xf32, #tpu.memory_space<vmem>>, vector<1x256xf32>
      %37 = tpu.reciprocal %36 : vector<1x256xf32> -> vector<1x256xf32>
      %c0_28 = arith.constant 0 : index
      %c0_29 = arith.constant 0 : index
      %38 = memref.load %arg7[%c0_28, %c0_29] : memref<1x1xf32, #tpu.memory_space<smem>>
      %c0_30 = arith.constant 0 : index
      %c0_31 = arith.constant 0 : index
      %39 = vector.load %arg11[%c0_30, %c0_31] : memref<32x256xf32, #tpu.memory_space<vmem>>, vector<32x256xf32>
      %40 = vector.broadcast %37 : vector<1x256xf32> to vector<32x256xf32>
      %41 = arith.mulf %39, %40 : vector<32x256xf32>
      %42 = vector.broadcast %38 : f32 to vector<32x256xf32>
      %43 = arith.mulf %42, %41 : vector<32x256xf32>
      %c0_32 = arith.constant 0 : index
      %c0_33 = arith.constant 0 : index
      %c0_34 = arith.constant 0 : index
      %44 = vector.load %arg4[%c0_32, %c0_33, %c0_34] : memref<1x32x256xf32, #tpu.memory_space<vmem>>, vector<1x32x256xf32>
      %45 = vector.shape_cast %44 : vector<1x32x256xf32> to vector<32x256xf32>
      %46 = arith.addf %43, %45 : vector<32x256xf32>
      %c0_35 = arith.constant 0 : index
      %c0_36 = arith.constant 0 : index
      %c0_37 = arith.constant 0 : index
      %47 = vector.load %arg8[%c0_35, %c0_36, %c0_37] : memref<1x32x256xf32, #tpu.memory_space<vmem>>, vector<1x32x256xf32>
      %48 = vector.shape_cast %47 : vector<1x32x256xf32> to vector<32x256xf32>
      %49 = vector.shape_cast %46 : vector<32x256xf32> to vector<1x32x256xf32>
      tpu.vector_store %arg8[%c0_35, %c0_36, %c0_37], %49 {strides = array<i32>} : memref<1x32x256xf32, #tpu.memory_space<vmem>>, vector<1x32x256xf32>,
    } else {
    }
    return
  }
  func.func @transform_0(%arg0: i32, %arg1: i32, %arg2: i32) -> (i32, i32, i32) {
    %c0_i32 = arith.constant 0 : i32
    %c0_i32_0 = arith.constant 0 : i32
    return %arg0, %c0_i32, %arg1 : i32, i32, i32
  }
  func.func @transform_1(%arg0: i32, %arg1: i32, %arg2: i32) -> (i32, i32, i32) {
    %c0_i32 = arith.constant 0 : i32
    %c0_i32_0 = arith.constant 0 : i32
    return %arg0, %c0_i32, %arg1 : i32, i32, i32
  }
  func.func @transform_2(%arg0: i32, %arg1: i32, %arg2: i32) -> (i32, i32, i32) {
    %c0_i32 = arith.constant 0 : i32
    %c0_i32_0 = arith.constant 0 : i32
    return %arg0, %c0_i32, %arg2 : i32, i32, i32
  }
  func.func @transform_3(%arg0: i32, %arg1: i32, %arg2: i32) -> (i32, i32, i32) {
    %c0_i32 = arith.constant 0 : i32
    %c0_i32_0 = arith.constant 0 : i32
    return %arg0, %c0_i32, %arg2 : i32, i32, i32
  }
  func.func @transform_4(%arg0: i32, %arg1: i32, %arg2: i32) -> (i32, i32) {
    %c0_i32 = arith.constant 0 : i32
    %c0_i32_0 = arith.constant 0 : i32
    %c0_i32_1 = arith.constant 0 : i32
    return %c0_i32, %c0_i32_0 : i32, i32
  }
  func.func @transform_5(%arg0: i32, %arg1: i32, %arg2: i32) -> (i32, i32, i32) {
    %c0_i32 = arith.constant 0 : i32
    %c0_i32_0 = arith.constant 0 : i32
    return %arg0, %c0_i32, %arg1 : i32, i32, i32
  }
}

</mosaic_0001>

<llo_original>
// kernel: tpu_custom_call.1
$region0: #{tpu_custom_call.1}
  #allocation0 [shape = 'u32[]', space=smem, size = 0x4, offset = 0x4, fixed_abs, tag = 'smem constant byte address 0x4 - core index']
  #allocation1 [shape = 'u32[72,128]{1,0:T(1,128)}', space=vmem, size = 0x9000, scoped, tag = 'internal scratch']
  #allocation2 [shape = 'f32[1,256]{1,0:T(1,128)}', space=vmem, size = 0x400, scoped, tag = 'scratch operand']
  #allocation3 [shape = 'f32[1,256]{1,0:T(1,128)}', space=vmem, size = 0x400, scoped, tag = 'scratch operand']
  #allocation4 [shape = 'f32[32,256]{1,0:T(8,128)}', space=vmem, size = 0x8000, scoped, tag = 'scratch operand']
  #allocation5 [shape = 'f32[1,1]{1,0:T(1,128)S(6)}', space=smem, size = 0x200, scoped, tag = 'scoped memory for tpu_custom_call.1']
  %s0 = inlined_call_operand.hbm [shape: bf16[2,16,256], index: 0, kind: input, shape index: {}]
  %s1 = inlined_call_operand.hbm [shape: f32[2,32,256], index: 1, kind: input, shape index: {}]
  %s2 = inlined_call_operand.hbm [shape: bf16[2,16,256], index: 2, kind: input, shape index: {}]
  %s3 = inlined_call_operand.hbm [shape: bf16[2,32,256], index: 3, kind: input, shape index: {}]
  %s4 = inlined_call_operand.<no memory space> [shape: f32[1,1], index: 4, kind: input, shape index: {}]
  %s5 = inlined_call_operand.hbm [shape: f32[2,32,256], index: 5, kind: output, shape index: {}]
  %s6 = sld [smem:[#allocation0]]
  $region77: #{tpu_custom_call.1} parent=0
    _
  %s8 = ssub.s32 1, %s6
  %s9 = scalar_select 0, %s8, %s6
  %10 = sst [smem:[#allocation5]] %s4
  $region1: #{tpu_custom_call.1} parent=0
    #allocation6 [shape = 'u8[16384]{0}', space=vmem, size = 0x4000, scoped, tag = 'input window, operand 0']
    #allocation7 [shape = 's32[2]{0}', space=sflag, size = 0x8, scoped, tag = 'scoped memory for tpu_custom_call.1']
    #allocation8 [shape = 's32[2]{0}', space=sflag, size = 0x8, scoped, tag = 'scoped memory for tpu_custom_call.1']
    #allocation9 [shape = 'u8[65536]{0}', space=vmem, size = 0x10000, scoped, tag = 'input window, operand 1']
    #allocation10 [shape = 's32[2]{0}', space=sflag, size = 0x8, scoped, tag = 'scoped memory for tpu_custom_call.1']
    #allocation11 [shape = 'u8[16384]{0}', space=vmem, size = 0x4000, scoped, tag = 'input window, operand 2']
    #allocation12 [shape = 'u8[32768]{0}', space=vmem, size = 0x8000, scoped, tag = 'input window, operand 3']
    #allocation13 [shape = 's32[2]{0}', space=sflag, size = 0x8, scoped, tag = 'scoped memory for tpu_custom_call.1']
    #allocation14 [shape = 'u8[65536]{0}', space=vmem, size = 0x10000, scoped, tag = 'output window, operand 0']
    %11 = vsyncpa [#allocation7], 0
    %s12 = scalar_lea.sflag [#allocation7], 1
    %13 = vsyncpa %s12, 0
    %14 = vsyncpa [#allocation10], 0
    %s15 = scalar_lea.sflag [#allocation10], 1
    %16 = vsyncpa %s15, 0
    %17 = vsyncpa [#allocation13], 0
    %s18 = scalar_lea.sflag [#allocation13], 1
    %19 = vsyncpa %s18, 0
    %20 = vsyncpa [#allocation8], 0
    %s21 = scalar_lea.sflag [#allocation8], 1
    %22 = vsyncpa %s21, 0
    loop: start=0, step=1, limit=4
    $region2: #{tpu_custom_call.1} parent=1 // loop_pre_header
      _
    $region3: #{tpu_custom_call.1} parent=1 // loop_header
      %s24 = sphi 0, %s28
      %p25 = scmp.ge.s32.totalorder %s24, 4
      %s31 = sphi 0, %s50
      %s32 = sphi 0, %s46
      %s33 = sphi 0, %s42
      %s34 = sphi 0, %s31
      %s35 = sphi 0, %s32
      %s36 = sphi 0, %s33
      %s37 = sphi 0, %s34
      %s38 = sphi 0, %s35
      %s39 = sphi 0, %s36
      %s55 = sphi 0, %s57
      %s58 = sphi 0, %s55
      %s59 = sphi 0, %s58
      %s75 = sphi 0, %s59
      %s83 = sphi 0, %s85
      %s86 = sphi 0, %s83
      %s87 = sphi 0, %s86
      %s103 = sphi 0, %s87
      %s111 = sphi 0, %s113
      %s114 = sphi 0, %s111
      %s115 = sphi 0, %s114
      %s131 = sphi 0, %s115
      %s139 = sphi 0, %s141
      %s142 = sphi 0, %s139
      %s143 = sphi 0, %s142
      %s159 = sphi 0, %s143
      %s163 = sphi 0, %s163
      %s165 = sphi 0, %s163
      %s166 = sphi 0, %s165
      %s180 = sphi 0, %s166
      %s188 = sphi 0, %s190
      %s191 = sphi 0, %s188
      %s192 = sphi 0, %s191
      %s208 = sphi 0, %s192
    $region4: #{tpu_custom_call.1} parent=1 // loop_header_branch
      %27 = sbr.rel (%p25) target = $region8
    $region5: #{tpu_custom_call.1} parent=1 // loop_body
      %s29 = ssub.s32 %s24, 1
      %s30 = ssub.s32 %s24, 2
      %s40 = sadd.s32 1, %s33
      %p41 = scmp.ge.s32.totalorder %s40, 1
      %s42 = scalar_select %p41, 0, %s40
      %s43 = sadd.s32 1, %s32
      %s44 = scalar_select %p41, %s43, %s32
      %p45 = scmp.ge.s32.totalorder %s44, 1
      %s46 = scalar_select %p45, 0, %s44
      %s47 = sadd.s32 1, %s31
      %s48 = scalar_select %p45, %s47, %s31
      %p49 = scmp.ge.s32.totalorder %s48, 2
      %s50 = scalar_select %p49, 0, %s48
      %s51 = ssub.s32 %s31, %s50
      %s52 = ssub.s32 %s32, %s46
      %s53 = sor.u32 %s51, %s52
      %p54 = scmp.eq.s32.totalorder %s53, 0
      %s56 = sadd.s32 %s55, 1
      %s57 = scalar_select %p54, %s55, %s56
      %p60 = pneg %p54
      %p61 = scmp.eq.s32.totalorder %s24, 1
      %p62 = por %p60, %p61
      %p63 = scmp.ne.s32.totalorder %s55, %s58
      %p64 = scmp.eq.s32.totalorder %s24, 0
      %p65 = por %p63, %p64
      %p66 = scmp.ne.s32.totalorder %s55, %s58
      %p67 = scmp.eq.s32.totalorder %s29, 1
      %p68 = por %p66, %p67
      %p69 = scmp.ne.s32.totalorder %s58, %s59
      %p70 = scmp.eq.s32.totalorder %s29, 0
      %p71 = por %p69, %p70
      %p72 = scmp.ne.s32.totalorder %s58, %s59
      %p73 = scmp.eq.s32.totalorder %s30, 1
      %p74 = por %p72, %p73
      %p76 = scmp.ne.s32.totalorder %s59, %s75
      %p77 = scmp.eq.s32.totalorder %s30, 0
      %p78 = por %p76, %p77
      %s79 = ssub.s32 %s31, %s50
      %s80 = ssub.s32 %s32, %s46
      %s81 = sor.u32 %s79, %s80
      %p82 = scmp.eq.s32.totalorder %s81, 0
      %s84 = sadd.s32 %s83, 1
      %s85 = scalar_select %p82, %s83, %s84
      %p88 = pneg %p82
      %p89 = scmp.eq.s32.totalorder %s24, 1
      %p90 = por %p88, %p89
      %p91 = scmp.ne.s32.totalorder %s83, %s86
      %p92 = scmp.eq.s32.totalorder %s24, 0
      %p93 = por %p91, %p92
      %p94 = scmp.ne.s32.totalorder %s83, %s86
      %p95 = scmp.eq.s32.totalorder %s29, 1
      %p96 = por %p94, %p95
      %p97 = scmp.ne.s32.totalorder %s86, %s87
      %p98 = scmp.eq.s32.totalorder %s29, 0
      %p99 = por %p97, %p98
      %p100 = scmp.ne.s32.totalorder %s86, %s87
      %p101 = scmp.eq.s32.totalorder %s30, 1
      %p102 = por %p100, %p101
      %p104 = scmp.ne.s32.totalorder %s87, %s103
      %p105 = scmp.eq.s32.totalorder %s30, 0
      %p106 = por %p104, %p105
      %s107 = ssub.s32 %s31, %s50
      %s108 = ssub.s32 %s33, %s42
      %s109 = sor.u32 %s107, %s108
      %p110 = scmp.eq.s32.totalorder %s109, 0
      %s112 = sadd.s32 %s111, 1
      %s113 = scalar_select %p110, %s111, %s112
      %p116 = pneg %p110
      %p117 = scmp.eq.s32.totalorder %s24, 1
      %p118 = por %p116, %p117
      %p119 = scmp.ne.s32.totalorder %s111, %s114
      %p120 = scmp.eq.s32.totalorder %s24, 0
      %p121 = por %p119, %p120
      %p122 = scmp.ne.s32.totalorder %s111, %s114
      %p123 = scmp.eq.s32.totalorder %s29, 1
      %p124 = por %p122, %p123
      %p125 = scmp.ne.s32.totalorder %s114, %s115
      %p126 = scmp.eq.s32.totalorder %s29, 0
      %p127 = por %p125, %p126
      %p128 = scmp.ne.s32.totalorder %s114, %s115
      %p129 = scmp.eq.s32.totalorder %s30, 1
      %p130 = por %p128, %p129
      %p132 = scmp.ne.s32.totalorder %s115, %s131
      %p133 = scmp.eq.s32.totalorder %s30, 0
      %p134 = por %p132, %p133
      %s135 = ssub.s32 %s31, %s50
      %s136 = ssub.s32 %s33, %s42
      %s137 = sor.u32 %s135, %s136
      %p138 = scmp.eq.s32.totalorder %s137, 0
      %s140 = sadd.s32 %s139, 1
      %s141 = scalar_select %p138, %s139, %s140
      %p144 = pneg %p138
      %p145 = scmp.eq.s32.totalorder %s24, 1
      %p146 = por %p144, %p145
      %p147 = scmp.ne.s32.totalorder %s139, %s142
      %p148 = scmp.eq.s32.totalorder %s24, 0
      %p149 = por %p147, %p148
      %p150 = scmp.ne.s32.totalorder %s139, %s142
      %p151 = scmp.eq.s32.totalorder %s29, 1
      %p152 = por %p150, %p151
      %p153 = scmp.ne.s32.totalorder %s142, %s143
      %p154 = scmp.eq.s32.totalorder %s29, 0
      %p155 = por %p153, %p154
      %p156 = scmp.ne.s32.totalorder %s142, %s143
      %p157 = scmp.eq.s32.totalorder %s30, 1
      %p158 = por %p156, %p157
      %p160 = scmp.ne.s32.totalorder %s143, %s159
      %p161 = scmp.eq.s32.totalorder %s30, 0
      %p162 = por %p160, %p161
      %s164 = sadd.s32 %s163, 1
      %p167 = scmp.eq.s32.totalorder %s24, 1
      %p168 = scmp.ne.s32.totalorder %s163, %s165
      %p169 = scmp.eq.s32.totalorder %s24, 0
      %p170 = por %p168, %p169
      %p171 = scmp.ne.s32.totalorder %s163, %s165
      %p172 = scmp.eq.s32.totalorder %s29, 1
      %p173 = por %p171, %p172
      %p174 = scmp.ne.s32.totalorder %s165, %s166
      %p175 = scmp.eq.s32.totalorder %s29, 0
      %p176 = por %p174, %p175
      %p177 = scmp.ne.s32.totalorder %s165, %s166
      %p178 = scmp.eq.s32.totalorder %s30, 1
      %p179 = por %p177, %p178
      %p181 = scmp.ne.s32.totalorder %s166, %s180
      %p182 = scmp.eq.s32.totalorder %s30, 0
      %p183 = por %p181, %p182
      %s184 = ssub.s32 %s31, %s50
      %s185 = ssub.s32 %s32, %s46
      %s186 = sor.u32 %s184, %s185
      %p187 = scmp.eq.s32.totalorder %s186, 0
      %s189 = sadd.s32 %s188, 1
      %s190 = scalar_select %p187, %s188, %s189
      %p193 = pneg %p187
      %p194 = scmp.eq.s32.totalorder %s24, 1
      %p195 = por %p193, %p194
      %p196 = scmp.ne.s32.totalorder %s188, %s191
      %p197 = scmp.eq.s32.totalorder %s24, 0
      %p198 = por %p196, %p197
      %p199 = scmp.ne.s32.totalorder %s188, %s191
      %p200 = scmp.eq.s32.totalorder %s29, 1
      %p201 = por %p199, %p200
      %p202 = scmp.ne.s32.totalorder %s191, %s192
      %p203 = scmp.eq.s32.totalorder %s29, 0
      %p204 = por %p202, %p203
      %p205 = scmp.ne.s32.totalorder %s191, %s192
      %p206 = scmp.eq.s32.totalorder %s30, 1
      %p207 = por %p205, %p206
      %p209 = scmp.ne.s32.totalorder %s192, %s208
      %p210 = scmp.eq.s32.totalorder %s30, 0
      %p211 = por %p209, %p210
      %p212 = scmp.le.s32.totalorder 1, %s24
      %p213 = scmp.lt.s32.totalorder %s24, 3
      %p214 = pnand %p212, %p213
      %p215 = pneg %p214
      // Predicated region
      $region9: #{tpu_custom_call.1} parent=5 // pred_check
        _
      $region10: #{tpu_custom_call.1} parent=5 // pred_check_branch
        %217 = sbr.rel (%p214) target = $region12
      $region11: #{tpu_custom_call.1} parent=5 // pred_region
        %s218 = ssub.s32 %s24, 1
        // Predicated region
        $region13: #{tpu_custom_call.1} parent=11 // pred_check
          %p219 = pneg %p176
        $region14: #{tpu_custom_call.1} parent=11 // pred_check_branch
          %221 = sbr.rel (%p219) target = $region16
        $region15: #{tpu_custom_call.1} parent=11 // pred_region
          _
        $region16: #{tpu_custom_call.1} parent=11 // pred_fallthru
          _
      $region12: #{tpu_custom_call.1} parent=5 // pred_fallthru
        _
      %p222 = scmp.lt.s32.totalorder %s24, 2
      // Predicated region
      $region17: #{tpu_custom_call.1} parent=5 // pred_check
        %p223 = pneg %p222
      $region18: #{tpu_custom_call.1} parent=5 // pred_check_branch
        %225 = sbr.rel (%p223) target = $region20
      $region19: #{tpu_custom_call.1} parent=5 // pred_region
        // Predicated region
        $region21: #{tpu_custom_call.1} parent=19 // pred_check
          %p226 = pneg %p65
        $region22: #{tpu_custom_call.1} parent=19 // pred_check_branch
          %228 = sbr.rel (%p226) target = $region24
        $region23: #{tpu_custom_call.1} parent=19 // pred_region
          %s229 = sand.u32 %s55, 1
          %s230 = scalar_lea.sflag [#allocation7], %s229
          %s231 = sand.u32 %s55, 1
          %s232 = smul.addr %s231, 16
          %s233 = scalar_lea.vmem [#allocation6], %s232
          %s234 = smul.u32 2, %s32
          %236 = vsyncadd %s230, 0
          %s237 = smul.addr %s31, 4
          %s238 = sadd.s32 %s234, %s237
          %s239 = smul.addr %s238, 4
          %s240 = scalar_lea.hbm %s0, %s239
          %s241 = sshll.u32 %s240, 4
          %s242 = int_to_ptr.hbm [resolvable:$true] %s241
          %s243 = sshll.u32 %s233, 4
          %s244 = int_to_ptr.vmem [resolvable:$true] %s243
          %249 = dma.hbm_to_vmem [thread:$0]  %s242, 256, %s244, %s230, 128, 128, 8
        $region24: #{tpu_custom_call.1} parent=19 // pred_fallthru
          _
        // Predicated region
        $region25: #{tpu_custom_call.1} parent=19 // pred_check
          %p250 = pneg %p93
        $region26: #{tpu_custom_call.1} parent=19 // pred_check_branch
          %252 = sbr.rel (%p250) target = $region28
        $region27: #{tpu_custom_call.1} parent=19 // pred_region
          %s253 = sand.u32 %s24, 1
          %s254 = scalar_lea.sflag [#allocation10], %s253
          %s255 = sand.u32 %s83, 1
          %s256 = smul.addr %s255, 64
          %s257 = scalar_lea.vmem [#allocation9], %s256
          %s258 = smul.u32 2, %s32
          %260 = vsyncadd %s254, 0
          %s261 = smul.addr %s31, 8
          %s262 = sadd.s32 %s258, %s261
          %s263 = smul.addr %s262, 8
          %s264 = scalar_lea.hbm %s1, %s263
          %s265 = sshll.u32 %s264, 4
          %s266 = int_to_ptr.hbm [resolvable:$true] %s265
          %s267 = sshll.u32 %s257, 4
          %s268 = int_to_ptr.vmem [resolvable:$true] %s267
          %273 = dma.hbm_to_vmem [thread:$0]  %s266, 1024, %s268, %s254, 256, 256, 16
        $region28: #{tpu_custom_call.1} parent=19 // pred_fallthru
          _
        // Predicated region
        $region29: #{tpu_custom_call.1} parent=19 // pred_check
          %p274 = pneg %p121
        $region30: #{tpu_custom_call.1} parent=19 // pred_check_branch
          %276 = sbr.rel (%p274) target = $region32
        $region31: #{tpu_custom_call.1} parent=19 // pred_region
          %s277 = sand.u32 %s24, 1
          %s278 = scalar_lea.sflag [#allocation10], %s277
          %s279 = sand.u32 %s111, 1
          %s280 = smul.addr %s279, 16
          %s281 = scalar_lea.vmem [#allocation11], %s280
          %s282 = smul.u32 2, %s33
          %284 = vsyncadd %s278, 0
          %s285 = smul.addr %s31, 4
          %s286 = sadd.s32 %s282, %s285
          %s287 = smul.addr %s286, 4
          %s288 = scalar_lea.hbm %s2, %s287
          %s289 = sshll.u32 %s288, 4
          %s290 = int_to_ptr.hbm [resolvable:$true] %s289
          %s291 = sshll.u32 %s281, 4
          %s292 = int_to_ptr.vmem [resolvable:$true] %s291
          %297 = dma.hbm_to_vmem [thread:$0]  %s290, 256, %s292, %s278, 128, 128, 8
        $region32: #{tpu_custom_call.1} parent=19 // pred_fallthru
          _
        // Predicated region
        $region33: #{tpu_custom_call.1} parent=19 // pred_check
          %p298 = pneg %p149
        $region34: #{tpu_custom_call.1} parent=19 // pred_check_branch
          %300 = sbr.rel (%p298) target = $region36
        $region35: #{tpu_custom_call.1} parent=19 // pred_region
          %s301 = sand.u32 %s139, 1
          %s302 = scalar_lea.sflag [#allocation13], %s301
          %s303 = sand.u32 %s139, 1
          %s304 = smul.addr %s303, 32
          %s305 = scalar_lea.vmem [#allocation12], %s304
          %s306 = smul.u32 2, %s33
          %308 = vsyncadd %s302, 0
          %s309 = smul.addr %s31, 8
          %s310 = sadd.s32 %s306, %s309
          %s311 = smul.addr %s310, 4
          %s312 = scalar_lea.hbm %s3, %s311
          %s313 = sshll.u32 %s312, 4
          %s314 = int_to_ptr.hbm [resolvable:$true] %s313
          %s315 = sshll.u32 %s305, 4
          %s316 = int_to_ptr.vmem [resolvable:$true] %s315
          %321 = dma.hbm_to_vmem [thread:$0]  %s314, 512, %s316, %s302, 128, 128, 8
        $region36: #{tpu_custom_call.1} parent=19 // pred_fallthru
          _
      $region20: #{tpu_custom_call.1} parent=5 // pred_fallthru
        _
      %p322 = scmp.le.s32.totalorder 1, %s24
      %p323 = scmp.lt.s32.totalorder %s24, 3
      %p324 = pnand %p322, %p323
      %p325 = pneg %p324
      // Predicated region
      $region37: #{tpu_custom_call.1} parent=5 // pred_check
        _
      $region38: #{tpu_custom_call.1} parent=5 // pred_check_branch
        %327 = sbr.rel (%p324) target = $region40
      $region39: #{tpu_custom_call.1} parent=5 // pred_region
        %s328 = ssub.s32 %s24, 1
        %s329 = sand.u32 %s58, 1
        %s330 = scalar_lea.sflag [#allocation7], %s329
        %s331 = sand.u32 %s58, 1
        %s332 = smul.addr %s331, 16
        %s333 = scalar_lea.vmem [#allocation6], %s332
        // Predicated region
        $region41: #{tpu_custom_call.1} parent=39 // pred_check
          %p334 = pneg %p71
        $region42: #{tpu_custom_call.1} parent=39 // pred_check_branch
          %336 = sbr.rel (%p334) target = $region44
        $region43: #{tpu_custom_call.1} parent=39 // pred_region
          %338 = dma.done %s330, 256
        $region44: #{tpu_custom_call.1} parent=39 // pred_fallthru
          _
        %s339 = sand.u32 %s29, 1
        %s340 = scalar_lea.sflag [#allocation10], %s339
        %s341 = sand.u32 %s86, 1
        %s342 = smul.addr %s341, 64
        %s343 = scalar_lea.vmem [#allocation9], %s342
        // Predicated region
        $region45: #{tpu_custom_call.1} parent=39 // pred_check
          %p344 = pneg %p99
        $region46: #{tpu_custom_call.1} parent=39 // pred_check_branch
          %346 = sbr.rel (%p344) target = $region48
        $region47: #{tpu_custom_call.1} parent=39 // pred_region
          %348 = dma.done %s340, 1024
        $region48: #{tpu_custom_call.1} parent=39 // pred_fallthru
          _
        %s349 = sand.u32 %s29, 1
        %s350 = scalar_lea.sflag [#allocation10], %s349
        %s351 = sand.u32 %s114, 1
        %s352 = smul.addr %s351, 16
        %s353 = scalar_lea.vmem [#allocation11], %s352
        // Predicated region
        $region49: #{tpu_custom_call.1} parent=39 // pred_check
          %p354 = pneg %p127
        $region50: #{tpu_custom_call.1} parent=39 // pred_check_branch
          %356 = sbr.rel (%p354) target = $region52
        $region51: #{tpu_custom_call.1} parent=39 // pred_region
          %358 = dma.done %s350, 256
        $region52: #{tpu_custom_call.1} parent=39 // pred_fallthru
          _
        %s359 = sand.u32 %s142, 1
        %s360 = scalar_lea.sflag [#allocation13], %s359
        %s361 = sand.u32 %s142, 1
        %s362 = smul.addr %s361, 32
        %s363 = scalar_lea.vmem [#allocation12], %s362
        // Predicated region
        $region53: #{tpu_custom_call.1} parent=39 // pred_check
          %p364 = pneg %p155
        $region54: #{tpu_custom_call.1} parent=39 // pred_check_branch
          %366 = sbr.rel (%p364) target = $region56
        $region55: #{tpu_custom_call.1} parent=39 // pred_region
          %368 = dma.done %s360, 512
        $region56: #{tpu_custom_call.1} parent=39 // pred_fallthru
          _
        %s369 = sand.u32 %s58, 1
        %s370 = scalar_lea.sflag [#allocation7], %s369
        %s371 = sand.u32 %s58, 1
        %s372 = smul.addr %s371, 16
        %s373 = scalar_lea.vmem [#allocation6], %s372
        %p374 = pneg %p71
        %p375 = pneg %p68
        %s376 = sand.u32 %s29, 1
        %s377 = scalar_lea.sflag [#allocation10], %s376
        %s378 = sand.u32 %s86, 1
        %s379 = smul.addr %s378, 64
        %s380 = scalar_lea.vmem [#allocation9], %s379
        %p381 = pneg %p99
        %p382 = pneg %p96
        %s383 = sand.u32 %s29, 1
        %s384 = scalar_lea.sflag [#allocation10], %s383
        %s385 = sand.u32 %s114, 1
        %s386 = smul.addr %s385, 16
        %s387 = scalar_lea.vmem [#allocation11], %s386
        %p388 = pneg %p127
        %p389 = pneg %p124
        %s390 = sand.u32 %s142, 1
        %s391 = scalar_lea.sflag [#allocation13], %s390
        %s392 = sand.u32 %s142, 1
        %s393 = smul.addr %s392, 32
        %s394 = scalar_lea.vmem [#allocation12], %s393
        %p395 = pneg %p155
        %p396 = pneg %p152
        %p397 = pneg %p176
        %p398 = pneg %p173
        %p399 = pneg %p204
        %p400 = pneg %p201
        %s401 = sand.u32 %s191, 1
        %s402 = scalar_lea.sflag [#allocation8], %s401
        %s403 = sand.u32 %s191, 1
        %s404 = smul.addr %s403, 64
        %s405 = scalar_lea.vmem [#allocation14], %s404
        %s406 = smul.u32 2, %s35
        %s407 = smul.u32 2, %s35
        %s408 = smul.u32 2, %s36
        %s409 = smul.u32 2, %s36
        %s410 = smul.u32 2, %s35
        %p412 = scmp.eq.s32.totalorder %s36, 0
        // Predicated region
        $region57: #{tpu_custom_call.1} parent=39 // pred_check
          %p413 = pneg %p412
        $region58: #{tpu_custom_call.1} parent=39 // pred_check_branch
          %415 = sbr.rel (%p413) target = $region60
        $region59: #{tpu_custom_call.1} parent=39 // pred_region
          %v416 = vlaneseq
          %vm417 = vcmp.ge.s32.totalorder %v416, 0
          %vm418 = vcmp.lt.s32.totalorder %v416, 256
          %vm419 = vmand %vm417, %vm418
          %420 = vst.msk [vmem:[#allocation2] sm:$0x3] %vm419, -1e+30
          %421 = vst.msk [vmem:[#allocation3] sm:$0x3] %vm419, 0.0
          %422 = vst [vmem:[#allocation4] sm:$0xff] 0.0
          %423 = vst [vmem:[#allocation4 + $0x8] sm:$0xff] 0.0
          %424 = vst [vmem:[#allocation4 + $0x10] sm:$0xff] 0.0
          %425 = vst [vmem:[#allocation4 + $0x18] sm:$0xff] 0.0
          %426 = vst [vmem:[#allocation4 + $0x20] sm:$0xff] 0.0
          %427 = vst [vmem:[#allocation4 + $0x28] sm:$0xff] 0.0
          %428 = vst [vmem:[#allocation4 + $0x30] sm:$0xff] 0.0
          %429 = vst [vmem:[#allocation4 + $0x38] sm:$0xff] 0.0
        $region60: #{tpu_custom_call.1} parent=39 // pred_fallthru
          _
        %v430 = vld [vmem:[%s333] sm:$0xff]
        %v431 = vld [vmem:[%s333 + $0x8] sm:$0xff]
        %v432 = vld [vmem:[%s353] sm:$0xff]
        %v433 = vld [vmem:[%s353 + $0x8] sm:$0xff]
        %v434 = vld [vmem:[%s363] sm:$0xff]
        %v435 = vld [vmem:[%s363 + $0x8] sm:$0xff]
        %v436 = vld [vmem:[%s363 + $0x10] sm:$0xff]
        %v437 = vld [vmem:[%s363 + $0x18] sm:$0xff]
        %v440 = vunpack.c.l.b16 %v432
        %v441 = vunpack.c.h.b16 %v432
        %v442 = vunpack.c.l.b16 %v433
        %v443 = vunpack.c.h.b16 %v433
        %v444 = vpack.c.b16 %v442, %v440
        %v445 = vpack.c.b16 %v443, %v441
        %448 = vxpose.binary.xlu0.c.b16.start [1/16] %v445, %v444, 128
        %449 = vxpose.binary.xlu0.c.b16.cont [2/16] 0, 0, 128
        %450 = vxpose.binary.xlu0.c.b16.cont [3/16] 0, 0, 128
        %451 = vxpose.binary.xlu0.c.b16.cont [4/16] 0, 0, 128
        %452 = vxpose.binary.xlu0.c.b16.cont [5/16] 0, 0, 128
        %453 = vxpose.binary.xlu0.c.b16.cont [6/16] 0, 0, 128
        %454 = vxpose.binary.xlu0.c.b16.cont [7/16] 0, 0, 128
        %455 = vxpose.binary.xlu0.c.b16.end [8/16] 0, 0, 128
        %v456 = vpop.trf.xlu0
        %v457 = vpop.trf.xlu0
        %v458 = vpop.trf.xlu0
        %v459 = vpop.trf.xlu0
        %v460 = vpop.trf.xlu0
        %v461 = vpop.trf.xlu0
        %v462 = vpop.trf.xlu0
        %v463 = vpop.trf.xlu0
        %v464 = vpop.trf.xlu0
        %v465 = vpop.trf.xlu0
        %v466 = vpop.trf.xlu0
        %v467 = vpop.trf.xlu0
        %v468 = vpop.trf.xlu0
        %v469 = vpop.trf.xlu0
        %v470 = vpop.trf.xlu0
        %v471 = vpop.trf.xlu0
        %v474 = vunpack.c.l.b16 %v430
        %v475 = vunpack.c.h.b16 %v430
        %v476 = vunpack.c.l.b16 %v431
        %v477 = vunpack.c.h.b16 %v431
        %v478 = vpack.c.b16 %v476, %v474
        %v479 = vpack.c.b16 %v477, %v475
        %vm482 = vcmask 130048
        %v484 = vsel %vm482, %v456, 0
        %v487 = vsel %vm482, %v458, 0
        %v490 = vsel %vm482, %v460, 0
        %v493 = vsel %vm482, %v462, 0
        %v496 = vsel %vm482, %v464, 0
        %v499 = vsel %vm482, %v466, 0
        %v502 = vsel %vm482, %v468, 0
        %v505 = vsel %vm482, %v470, 0
        %v508 = vsel %vm482, %v457, 0
        %v511 = vsel %vm482, %v459, 0
        %v514 = vsel %vm482, %v461, 0
        %v517 = vsel %vm482, %v463, 0
        %v520 = vsel %vm482, %v465, 0
        %v523 = vsel %vm482, %v467, 0
        %v526 = vsel %vm482, %v469, 0
        %v529 = vsel %vm482, %v471, 0
        %531 = vmatpush.bf16.msra.mxu0 0
        %532 = vmatpush.bf16.msra.mxu0 0
        %533 = vmatpush.bf16.msra.mxu0 0
        %534 = vmatpush.bf16.msra.mxu0 0
        %535 = vmatpush.bf16.msra.mxu0 0
        %536 = vmatpush.bf16.msra.mxu0 0
        %537 = vmatpush.bf16.msra.mxu0 0
        %538 = vmatpush.bf16.msra.mxu0 %v478
        %539 = vmatmul.bf16.gmra.mxu0 %v484
        %v540 = vpop.f32.mrf.mxu0
        %v541 = vadd.f32 0.0, %v540
        %v542 = vpop.f32.mrf.mxu0
        %v543 = vadd.f32 0.0, %v542
        %544 = vmatmul.bf16.gmra.mxu0 %v487
        %v545 = vpop.f32.mrf.mxu0
        %v546 = vadd.f32 0.0, %v545
        %v547 = vpop.f32.mrf.mxu0
        %v548 = vadd.f32 0.0, %v547
        %549 = vmatmul.bf16.gmra.mxu0 %v490
        %v550 = vpop.f32.mrf.mxu0
        %v551 = vadd.f32 0.0, %v550
        %v552 = vpop.f32.mrf.mxu0
        %v553 = vadd.f32 0.0, %v552
        %554 = vmatmul.bf16.gmra.mxu0 %v493
        %v555 = vpop.f32.mrf.mxu0
        %v556 = vadd.f32 0.0, %v555
        %v557 = vpop.f32.mrf.mxu0
        %v558 = vadd.f32 0.0, %v557
        %559 = vmatmul.bf16.gmra.mxu0 %v496
        %v560 = vpop.f32.mrf.mxu0
        %v561 = vadd.f32 0.0, %v560
        %v562 = vpop.f32.mrf.mxu0
        %v563 = vadd.f32 0.0, %v562
        %564 = vmatmul.bf16.gmra.mxu0 %v499
        %v565 = vpop.f32.mrf.mxu0
        %v566 = vadd.f32 0.0, %v565
        %v567 = vpop.f32.mrf.mxu0
        %v568 = vadd.f32 0.0, %v567
        %569 = vmatmul.bf16.gmra.mxu0 %v502
        %v570 = vpop.f32.mrf.mxu0
        %v571 = vadd.f32 0.0, %v570
        %v572 = vpop.f32.mrf.mxu0
        %v573 = vadd.f32 0.0, %v572
        %574 = vmatmul.bf16.gmra.mxu0 %v505
        %v575 = vpop.f32.mrf.mxu0
        %v576 = vadd.f32 0.0, %v575
        %v577 = vpop.f32.mrf.mxu0
        %v578 = vadd.f32 0.0, %v577
        %579 = vmatmul.bf16.gmra.mxu0 %v508
        %v580 = vpop.f32.mrf.mxu0
        %v581 = vadd.f32 0.0, %v580
        %v582 = vpop.f32.mrf.mxu0
        %v583 = vadd.f32 0.0, %v582
        %584 = vmatmul.bf16.gmra.mxu0 %v511
        %v585 = vpop.f32.mrf.mxu0
        %v586 = vadd.f32 0.0, %v585
        %v587 = vpop.f32.mrf.mxu0
        %v588 = vadd.f32 0.0, %v587
        %589 = vmatmul.bf16.gmra.mxu0 %v514
        %v590 = vpop.f32.mrf.mxu0
        %v591 = vadd.f32 0.0, %v590
        %v592 = vpop.f32.mrf.mxu0
        %v593 = vadd.f32 0.0, %v592
        %594 = vmatmul.bf16.gmra.mxu0 %v517
        %v595 = vpop.f32.mrf.mxu0
        %v596 = vadd.f32 0.0, %v595
        %v597 = vpop.f32.mrf.mxu0
        %v598 = vadd.f32 0.0, %v597
        %599 = vmatmul.bf16.gmra.mxu0 %v520
        %v600 = vpop.f32.mrf.mxu0
        %v601 = vadd.f32 0.0, %v600
        %v602 = vpop.f32.mrf.mxu0
        %v603 = vadd.f32 0.0, %v602
        %604 = vmatmul.bf16.gmra.mxu0 %v523
        %v605 = vpop.f32.mrf.mxu0
        %v606 = vadd.f32 0.0, %v605
        %v607 = vpop.f32.mrf.mxu0
        %v608 = vadd.f32 0.0, %v607
        %609 = vmatmul.bf16.gmra.mxu0 %v526
        %v610 = vpop.f32.mrf.mxu0
        %v611 = vadd.f32 0.0, %v610
        %v612 = vpop.f32.mrf.mxu0
        %v613 = vadd.f32 0.0, %v612
        %614 = vmatmul.bf16.gmra.mxu0 %v529
        %v615 = vpop.f32.mrf.mxu0
        %v616 = vadd.f32 0.0, %v615
        %v617 = vpop.f32.mrf.mxu0
        %v618 = vadd.f32 0.0, %v617
        %619 = vdwg.mxu0
        %620 = vmatpush.bf16.msra.mxu0 0
        %621 = vmatpush.bf16.msra.mxu0 0
        %622 = vmatpush.bf16.msra.mxu0 0
        %623 = vmatpush.bf16.msra.mxu0 0
        %624 = vmatpush.bf16.msra.mxu0 0
        %625 = vmatpush.bf16.msra.mxu0 0
        %626 = vmatpush.bf16.msra.mxu0 0
        %627 = vmatpush.bf16.msra.mxu0 %v479
        %628 = vmatmul.bf16.gmra.mxu0 %v484
        %v629 = vpop.f32.mrf.mxu0
        %v630 = vadd.f32 0.0, %v629
        %v631 = vpop.f32.mrf.mxu0
        %v632 = vadd.f32 0.0, %v631
        %633 = vmatmul.bf16.gmra.mxu0 %v487
        %v634 = vpop.f32.mrf.mxu0
        %v635 = vadd.f32 0.0, %v634
        %v636 = vpop.f32.mrf.mxu0
        %v637 = vadd.f32 0.0, %v636
        %638 = vmatmul.bf16.gmra.mxu0 %v490
        %v639 = vpop.f32.mrf.mxu0
        %v640 = vadd.f32 0.0, %v639
        %v641 = vpop.f32.mrf.mxu0
        %v642 = vadd.f32 0.0, %v641
        %643 = vmatmul.bf16.gmra.mxu0 %v493
        %v644 = vpop.f32.mrf.mxu0
        %v645 = vadd.f32 0.0, %v644
        %v646 = vpop.f32.mrf.mxu0
        %v647 = vadd.f32 0.0, %v646
        %648 = vmatmul.bf16.gmra.mxu0 %v496
        %v649 = vpop.f32.mrf.mxu0
        %v650 = vadd.f32 0.0, %v649
        %v651 = vpop.f32.mrf.mxu0
        %v652 = vadd.f32 0.0, %v651
        %653 = vmatmul.bf16.gmra.mxu0 %v499
        %v654 = vpop.f32.mrf.mxu0
        %v655 = vadd.f32 0.0, %v654
        %v656 = vpop.f32.mrf.mxu0
        %v657 = vadd.f32 0.0, %v656
        %658 = vmatmul.bf16.gmra.mxu0 %v502
        %v659 = vpop.f32.mrf.mxu0
        %v660 = vadd.f32 0.0, %v659
        %v661 = vpop.f32.mrf.mxu0
        %v662 = vadd.f32 0.0, %v661
        %663 = vmatmul.bf16.gmra.mxu0 %v505
        %v664 = vpop.f32.mrf.mxu0
        %v665 = vadd.f32 0.0, %v664
        %v666 = vpop.f32.mrf.mxu0
        %v667 = vadd.f32 0.0, %v666
        %668 = vmatmul.bf16.gmra.mxu0 %v508
        %v669 = vpop.f32.mrf.mxu0
        %v670 = vadd.f32 0.0, %v669
        %v671 = vpop.f32.mrf.mxu0
        %v672 = vadd.f32 0.0, %v671
        %673 = vmatmul.bf16.gmra.mxu0 %v511
        %v674 = vpop.f32.mrf.mxu0
        %v675 = vadd.f32 0.0, %v674
        %v676 = vpop.f32.mrf.mxu0
        %v677 = vadd.f32 0.0, %v676
        %678 = vmatmul.bf16.gmra.mxu0 %v514
        %v679 = vpop.f32.mrf.mxu0
        %v680 = vadd.f32 0.0, %v679
        %v681 = vpop.f32.mrf.mxu0
        %v682 = vadd.f32 0.0, %v681
        %683 = vmatmul.bf16.gmra.mxu0 %v517
        %v684 = vpop.f32.mrf.mxu0
        %v685 = vadd.f32 0.0, %v684
        %v686 = vpop.f32.mrf.mxu0
        %v687 = vadd.f32 0.0, %v686
        %688 = vmatmul.bf16.gmra.mxu0 %v520
        %v689 = vpop.f32.mrf.mxu0
        %v690 = vadd.f32 0.0, %v689
        %v691 = vpop.f32.mrf.mxu0
        %v692 = vadd.f32 0.0, %v691
        %693 = vmatmul.bf16.gmra.mxu0 %v523
        %v694 = vpop.f32.mrf.mxu0
        %v695 = vadd.f32 0.0, %v694
        %v696 = vpop.f32.mrf.mxu0
        %v697 = vadd.f32 0.0, %v696
        %698 = vmatmul.bf16.gmra.mxu0 %v526
        %v699 = vpop.f32.mrf.mxu0
        %v700 = vadd.f32 0.0, %v699
        %v701 = vpop.f32.mrf.mxu0
        %v702 = vadd.f32 0.0, %v701
        %703 = vmatmul.bf16.gmra.mxu0 %v529
        %v704 = vpop.f32.mrf.mxu0
        %v705 = vadd.f32 0.0, %v704
        %v706 = vpop.f32.mrf.mxu0
        %v707 = vadd.f32 0.0, %v706
        %708 = vdwg.mxu0
        %v709 = vld [vmem:[#allocation2] sm:$0x3]
        %v710 = vmax.f32 %v541, %v546
        %v711 = vmax.f32 %v543, %v548
        %v712 = vmax.f32 %v710, %v551
        %v713 = vmax.f32 %v711, %v553
        %v714 = vmax.f32 %v712, %v556
        %v715 = vmax.f32 %v713, %v558
        %v716 = vmax.f32 %v714, %v561
        %v717 = vmax.f32 %v715, %v563
        %v718 = vmax.f32 %v716, %v566
        %v719 = vmax.f32 %v717, %v568
        %v720 = vmax.f32 %v718, %v571
        %v721 = vmax.f32 %v719, %v573
        %v722 = vmax.f32 %v720, %v576
        %v723 = vmax.f32 %v721, %v578
        %v724 = vmax.f32 %v722, %v581
        %v725 = vmax.f32 %v723, %v583
        %v726 = vmax.f32 %v724, %v586
        %v727 = vmax.f32 %v725, %v588
        %v728 = vmax.f32 %v726, %v591
        %v729 = vmax.f32 %v727, %v593
        %v730 = vmax.f32 %v728, %v596
        %v731 = vmax.f32 %v729, %v598
        %v732 = vmax.f32 %v730, %v601
        %v733 = vmax.f32 %v731, %v603
        %v734 = vmax.f32 %v732, %v606
        %v735 = vmax.f32 %v733, %v608
        %v736 = vmax.f32 %v734, %v611
        %v737 = vmax.f32 %v735, %v613
        %v738 = vmax.f32 %v736, %v616
        %v739 = vmax.f32 %v737, %v618
        %v740 = vmax.f32 %v738, %v739
        %v741 = vrot.slane %v740, 4
        %v742 = vmax.f32 %v740, %v741
        %v743 = vrot.slane %v742, 2
        %v744 = vmax.f32 %v742, %v743
        %v745 = vrot.slane %v744, 1
        %v746 = vmax.f32 %v744, %v745
        %v747 = vmax.f32 %v630, %v635
        %v748 = vmax.f32 %v632, %v637
        %v749 = vmax.f32 %v747, %v640
        %v750 = vmax.f32 %v748, %v642
        %v751 = vmax.f32 %v749, %v645
        %v752 = vmax.f32 %v750, %v647
        %v753 = vmax.f32 %v751, %v650
        %v754 = vmax.f32 %v752, %v652
        %v755 = vmax.f32 %v753, %v655
        %v756 = vmax.f32 %v754, %v657
        %v757 = vmax.f32 %v755, %v660
        %v758 = vmax.f32 %v756, %v662
        %v759 = vmax.f32 %v757, %v665
        %v760 = vmax.f32 %v758, %v667
        %v761 = vmax.f32 %v759, %v670
        %v762 = vmax.f32 %v760, %v672
        %v763 = vmax.f32 %v761, %v675
        %v764 = vmax.f32 %v762, %v677
        %v765 = vmax.f32 %v763, %v680
        %v766 = vmax.f32 %v764, %v682
        %v767 = vmax.f32 %v765, %v685
        %v768 = vmax.f32 %v766, %v687
        %v769 = vmax.f32 %v767, %v690
        %v770 = vmax.f32 %v768, %v692
        %v771 = vmax.f32 %v769, %v695
        %v772 = vmax.f32 %v770, %v697
        %v773 = vmax.f32 %v771, %v700
        %v774 = vmax.f32 %v772, %v702
        %v775 = vmax.f32 %v773, %v705
        %v776 = vmax.f32 %v774, %v707
        %v777 = vmax.f32 %v775, %v776
        %v778 = vrot.slane %v777, 4
        %v779 = vmax.f32 %v777, %v778
        %v780 = vrot.slane %v779, 2
        %v781 = vmax.f32 %v779, %v780
        %v782 = vrot.slane %v781, 1
        %v783 = vmax.f32 %v781, %v782
        %v786 = vrot.slane %v783, 7
        %vm787 = vcmask 1040384
        %v788 = vsel %vm787, %v746, %v786
        %v790 = vmax.f32 %v709, %v788
        %v791 = vsub.f32 %v709, %v790
        %v792 = vmul.f32 %v791, 1.442695
        %v793 = vpow.pop %v792
        %v795 = vperm.slane %v790, 0
        %v796 = vperm.slane %v790, 1
        %v799 = vsub.f32 %v541, %v795
        %v800 = vsub.f32 %v630, %v796
        %v801 = vsub.f32 %v543, %v795
        %v802 = vsub.f32 %v632, %v796
        %v803 = vsub.f32 %v546, %v795
        %v804 = vsub.f32 %v635, %v796
        %v805 = vsub.f32 %v548, %v795
        %v806 = vsub.f32 %v637, %v796
        %v807 = vsub.f32 %v551, %v795
        %v808 = vsub.f32 %v640, %v796
        %v809 = vsub.f32 %v553, %v795
        %v810 = vsub.f32 %v642, %v796
        %v811 = vsub.f32 %v556, %v795
        %v812 = vsub.f32 %v645, %v796
        %v813 = vsub.f32 %v558, %v795
        %v814 = vsub.f32 %v647, %v796
        %v815 = vsub.f32 %v561, %v795
        %v816 = vsub.f32 %v650, %v796
        %v817 = vsub.f32 %v563, %v795
        %v818 = vsub.f32 %v652, %v796
        %v819 = vsub.f32 %v566, %v795
        %v820 = vsub.f32 %v655, %v796
        %v821 = vsub.f32 %v568, %v795
        %v822 = vsub.f32 %v657, %v796
        %v823 = vsub.f32 %v571, %v795
        %v824 = vsub.f32 %v660, %v796
        %v825 = vsub.f32 %v573, %v795
        %v826 = vsub.f32 %v662, %v796
        %v827 = vsub.f32 %v576, %v795
        %v828 = vsub.f32 %v665, %v796
        %v829 = vsub.f32 %v578, %v795
        %v830 = vsub.f32 %v667, %v796
        %v831 = vsub.f32 %v581, %v795
        %v832 = vsub.f32 %v670, %v796
        %v833 = vsub.f32 %v583, %v795
        %v834 = vsub.f32 %v672, %v796
        %v835 = vsub.f32 %v586, %v795
        %v836 = vsub.f32 %v675, %v796
        %v837 = vsub.f32 %v588, %v795
        %v838 = vsub.f32 %v677, %v796
        %v839 = vsub.f32 %v591, %v795
        %v840 = vsub.f32 %v680, %v796
        %v841 = vsub.f32 %v593, %v795
        %v842 = vsub.f32 %v682, %v796
        %v843 = vsub.f32 %v596, %v795
        %v844 = vsub.f32 %v685, %v796
        %v845 = vsub.f32 %v598, %v795
        %v846 = vsub.f32 %v687, %v796
        %v847 = vsub.f32 %v601, %v795
        %v848 = vsub.f32 %v690, %v796
        %v849 = vsub.f32 %v603, %v795
        %v850 = vsub.f32 %v692, %v796
        %v851 = vsub.f32 %v606, %v795
        %v852 = vsub.f32 %v695, %v796
        %v853 = vsub.f32 %v608, %v795
        %v854 = vsub.f32 %v697, %v796
        %v855 = vsub.f32 %v611, %v795
        %v856 = vsub.f32 %v700, %v796
        %v857 = vsub.f32 %v613, %v795
        %v858 = vsub.f32 %v702, %v796
        %v859 = vsub.f32 %v616, %v795
        %v860 = vsub.f32 %v705, %v796
        %v861 = vsub.f32 %v618, %v795
        %v862 = vsub.f32 %v707, %v796
        %v863 = vmul.f32 %v799, 1.442695
        %v864 = vpow.pop %v863
        %v865 = vmul.f32 %v800, 1.442695
        %v866 = vpow.pop %v865
        %v867 = vmul.f32 %v801, 1.442695
        %v868 = vpow.pop %v867
        %v869 = vmul.f32 %v802, 1.442695
        %v870 = vpow.pop %v869
        %v871 = vmul.f32 %v803, 1.442695
        %v872 = vpow.pop %v871
        %v873 = vmul.f32 %v804, 1.442695
        %v874 = vpow.pop %v873
        %v875 = vmul.f32 %v805, 1.442695
        %v876 = vpow.pop %v875
        %v877 = vmul.f32 %v806, 1.442695
        %v878 = vpow.pop %v877
        %v879 = vmul.f32 %v807, 1.442695
        %v880 = vpow.pop %v879
        %v881 = vmul.f32 %v808, 1.442695
        %v882 = vpow.pop %v881
        %v883 = vmul.f32 %v809, 1.442695
        %v884 = vpow.pop %v883
        %v885 = vmul.f32 %v810, 1.442695
        %v886 = vpow.pop %v885
        %v887 = vmul.f32 %v811, 1.442695
        %v888 = vpow.pop %v887
        %v889 = vmul.f32 %v812, 1.442695
        %v890 = vpow.pop %v889
        %v891 = vmul.f32 %v813, 1.442695
        %v892 = vpow.pop %v891
        %v893 = vmul.f32 %v814, 1.442695
        %v894 = vpow.pop %v893
        %v895 = vmul.f32 %v815, 1.442695
        %v896 = vpow.pop %v895
        %v897 = vmul.f32 %v816, 1.442695
        %v898 = vpow.pop %v897
        %v899 = vmul.f32 %v817, 1.442695
        %v900 = vpow.pop %v899
        %v901 = vmul.f32 %v818, 1.442695
        %v902 = vpow.pop %v901
        %v903 = vmul.f32 %v819, 1.442695
        %v904 = vpow.pop %v903
        %v905 = vmul.f32 %v820, 1.442695
        %v906 = vpow.pop %v905
        %v907 = vmul.f32 %v821, 1.442695
        %v908 = vpow.pop %v907
        %v909 = vmul.f32 %v822, 1.442695
        %v910 = vpow.pop %v909
        %v911 = vmul.f32 %v823, 1.442695
        %v912 = vpow.pop %v911
        %v913 = vmul.f32 %v824, 1.442695
        %v914 = vpow.pop %v913
        %v915 = vmul.f32 %v825, 1.442695
        %v916 = vpow.pop %v915
        %v917 = vmul.f32 %v826, 1.442695
        %v918 = vpow.pop %v917
        %v919 = vmul.f32 %v827, 1.442695
        %v920 = vpow.pop %v919
        %v921 = vmul.f32 %v828, 1.442695
        %v922 = vpow.pop %v921
        %v923 = vmul.f32 %v829, 1.442695
        %v924 = vpow.pop %v923
        %v925 = vmul.f32 %v830, 1.442695
        %v926 = vpow.pop %v925
        %v927 = vmul.f32 %v831, 1.442695
        %v928 = vpow.pop %v927
        %v929 = vmul.f32 %v832, 1.442695
        %v930 = vpow.pop %v929
        %v931 = vmul.f32 %v833, 1.442695
        %v932 = vpow.pop %v931
        %v933 = vmul.f32 %v834, 1.442695
        %v934 = vpow.pop %v933
        %v935 = vmul.f32 %v835, 1.442695
        %v936 = vpow.pop %v935
        %v937 = vmul.f32 %v836, 1.442695
        %v938 = vpow.pop %v937
        %v939 = vmul.f32 %v837, 1.442695
        %v940 = vpow.pop %v939
        %v941 = vmul.f32 %v838, 1.442695
        %v942 = vpow.pop %v941
        %v943 = vmul.f32 %v839, 1.442695
        %v944 = vpow.pop %v943
        %v945 = vmul.f32 %v840, 1.442695
        %v946 = vpow.pop %v945
        %v947 = vmul.f32 %v841, 1.442695
        %v948 = vpow.pop %v947
        %v949 = vmul.f32 %v842, 1.442695
        %v950 = vpow.pop %v949
        %v951 = vmul.f32 %v843, 1.442695
        %v952 = vpow.pop %v951
        %v953 = vmul.f32 %v844, 1.442695
        %v954 = vpow.pop %v953
        %v955 = vmul.f32 %v845, 1.442695
        %v956 = vpow.pop %v955
        %v957 = vmul.f32 %v846, 1.442695
        %v958 = vpow.pop %v957
        %v959 = vmul.f32 %v847, 1.442695
        %v960 = vpow.pop %v959
        %v961 = vmul.f32 %v848, 1.442695
        %v962 = vpow.pop %v961
        %v963 = vmul.f32 %v849, 1.442695
        %v964 = vpow.pop %v963
        %v965 = vmul.f32 %v850, 1.442695
        %v966 = vpow.pop %v965
        %v967 = vmul.f32 %v851, 1.442695
        %v968 = vpow.pop %v967
        %v969 = vmul.f32 %v852, 1.442695
        %v970 = vpow.pop %v969
        %v971 = vmul.f32 %v853, 1.442695
        %v972 = vpow.pop %v971
        %v973 = vmul.f32 %v854, 1.442695
        %v974 = vpow.pop %v973
        %v975 = vmul.f32 %v855, 1.442695
        %v976 = vpow.pop %v975
        %v977 = vmul.f32 %v856, 1.442695
        %v978 = vpow.pop %v977
        %v979 = vmul.f32 %v857, 1.442695
        %v980 = vpow.pop %v979
        %v981 = vmul.f32 %v858, 1.442695
        %v982 = vpow.pop %v981
        %v983 = vmul.f32 %v859, 1.442695
        %v984 = vpow.pop %v983
        %v985 = vmul.f32 %v860, 1.442695
        %v986 = vpow.pop %v985
        %v987 = vmul.f32 %v861, 1.442695
        %v988 = vpow.pop %v987
        %v989 = vmul.f32 %v862, 1.442695
        %v990 = vpow.pop %v989
        %v991 = vadd.f32 %v864, %v868
        %v992 = vadd.f32 %v991, %v872
        %v993 = vadd.f32 %v992, %v876
        %v994 = vadd.f32 %v993, %v880
        %v995 = vadd.f32 %v994, %v884
        %v996 = vadd.f32 %v995, %v888
        %v997 = vadd.f32 %v996, %v892
        %v998 = vadd.f32 %v997, %v896
        %v999 = vadd.f32 %v998, %v900
        %v1000 = vadd.f32 %v999, %v904
        %v1001 = vadd.f32 %v1000, %v908
        %v1002 = vadd.f32 %v1001, %v912
        %v1003 = vadd.f32 %v1002, %v916
        %v1004 = vadd.f32 %v1003, %v920
        %v1005 = vadd.f32 %v1004, %v924
        %v1006 = vadd.f32 %v1005, %v928
        %v1007 = vadd.f32 %v1006, %v932
        %v1008 = vadd.f32 %v1007, %v936
        %v1009 = vadd.f32 %v1008, %v940
        %v1010 = vadd.f32 %v1009, %v944
        %v1011 = vadd.f32 %v1010, %v948
        %v1012 = vadd.f32 %v1011, %v952
        %v1013 = vadd.f32 %v1012, %v956
        %v1014 = vadd.f32 %v1013, %v960
        %v1015 = vadd.f32 %v1014, %v964
        %v1016 = vadd.f32 %v1015, %v968
        %v1017 = vadd.f32 %v1016, %v972
        %v1018 = vadd.f32 %v1017, %v976
        %v1019 = vadd.f32 %v1018, %v980
        %v1020 = vadd.f32 %v1019, %v984
        %v1021 = vadd.f32 %v1020, %v988
        %v1022 = vrot.slane %v1021, 4
        %v1023 = vadd.f32 %v1021, %v1022
        %v1024 = vrot.slane %v1023, 2
        %v1025 = vadd.f32 %v1023, %v1024
        %v1026 = vrot.slane %v1025, 1
        %v1027 = vadd.f32 %v1025, %v1026
        %v1028 = vadd.f32 %v866, %v870
        %v1029 = vadd.f32 %v1028, %v874
        %v1030 = vadd.f32 %v1029, %v878
        %v1031 = vadd.f32 %v1030, %v882
        %v1032 = vadd.f32 %v1031, %v886
        %v1033 = vadd.f32 %v1032, %v890
        %v1034 = vadd.f32 %v1033, %v894
        %v1035 = vadd.f32 %v1034, %v898
        %v1036 = vadd.f32 %v1035, %v902
        %v1037 = vadd.f32 %v1036, %v906
        %v1038 = vadd.f32 %v1037, %v910
        %v1039 = vadd.f32 %v1038, %v914
        %v1040 = vadd.f32 %v1039, %v918
        %v1041 = vadd.f32 %v1040, %v922
        %v1042 = vadd.f32 %v1041, %v926
        %v1043 = vadd.f32 %v1042, %v930
        %v1044 = vadd.f32 %v1043, %v934
        %v1045 = vadd.f32 %v1044, %v938
        %v1046 = vadd.f32 %v1045, %v942
        %v1047 = vadd.f32 %v1046, %v946
        %v1048 = vadd.f32 %v1047, %v950
        %v1049 = vadd.f32 %v1048, %v954
        %v1050 = vadd.f32 %v1049, %v958
        %v1051 = vadd.f32 %v1050, %v962
        %v1052 = vadd.f32 %v1051, %v966
        %v1053 = vadd.f32 %v1052, %v970
        %v1054 = vadd.f32 %v1053, %v974
        %v1055 = vadd.f32 %v1054, %v978
        %v1056 = vadd.f32 %v1055, %v982
        %v1057 = vadd.f32 %v1056, %v986
        %v1058 = vadd.f32 %v1057, %v990
        %v1059 = vrot.slane %v1058, 4
        %v1060 = vadd.f32 %v1058, %v1059
        %v1061 = vrot.slane %v1060, 2
        %v1062 = vadd.f32 %v1060, %v1061
        %v1063 = vrot.slane %v1062, 1
        %v1064 = vadd.f32 %v1062, %v1063
        %v1065 = vpack.c.bf16 %v868, %v864
        %v1066 = vpack.c.bf16 %v870, %v866
        %v1067 = vpack.c.bf16 %v876, %v872
        %v1068 = vpack.c.bf16 %v878, %v874
        %v1069 = vpack.c.bf16 %v884, %v880
        %v1070 = vpack.c.bf16 %v886, %v882
        %v1071 = vpack.c.bf16 %v892, %v888
        %v1072 = vpack.c.bf16 %v894, %v890
        %v1073 = vpack.c.bf16 %v900, %v896
        %v1074 = vpack.c.bf16 %v902, %v898
        %v1075 = vpack.c.bf16 %v908, %v904
        %v1076 = vpack.c.bf16 %v910, %v906
        %v1077 = vpack.c.bf16 %v916, %v912
        %v1078 = vpack.c.bf16 %v918, %v914
        %v1079 = vpack.c.bf16 %v924, %v920
        %v1080 = vpack.c.bf16 %v926, %v922
        %v1081 = vpack.c.bf16 %v932, %v928
        %v1082 = vpack.c.bf16 %v934, %v930
        %v1083 = vpack.c.bf16 %v940, %v936
        %v1084 = vpack.c.bf16 %v942, %v938
        %v1085 = vpack.c.bf16 %v948, %v944
        %v1086 = vpack.c.bf16 %v950, %v946
        %v1087 = vpack.c.bf16 %v956, %v952
        %v1088 = vpack.c.bf16 %v958, %v954
        %v1089 = vpack.c.bf16 %v964, %v960
        %v1090 = vpack.c.bf16 %v966, %v962
        %v1091 = vpack.c.bf16 %v972, %v968
        %v1092 = vpack.c.bf16 %v974, %v970
        %v1093 = vpack.c.bf16 %v980, %v976
        %v1094 = vpack.c.bf16 %v982, %v978
        %v1095 = vpack.c.bf16 %v988, %v984
        %v1096 = vpack.c.bf16 %v990, %v986
        %v1097 = vld [vmem:[#allocation3] sm:$0x3]
        %v1098 = vmul.f32 %v793, %v1097
        %v1101 = vrot.slane %v1064, 7
        %v1102 = vsel %vm787, %v1027, %v1101
        %v1104 = vadd.f32 %v1098, %v1102
        %v1105 = vlaneseq
        %vm1106 = vcmp.ge.s32.totalorder %v1105, 0
        %vm1107 = vcmp.lt.s32.totalorder %v1105, 256
        %vm1108 = vmand %vm1106, %vm1107
        %1109 = vst.msk [vmem:[#allocation3] sm:$0x3] %vm1108, %v1104
        %v1110 = vld [vmem:[#allocation4] sm:$0xff]
        %v1111 = vld [vmem:[#allocation4 + $0x8] sm:$0xff]
        %v1112 = vld [vmem:[#allocation4 + $0x10] sm:$0xff]
        %v1113 = vld [vmem:[#allocation4 + $0x18] sm:$0xff]
        %v1114 = vld [vmem:[#allocation4 + $0x20] sm:$0xff]
        %v1115 = vld [vmem:[#allocation4 + $0x28] sm:$0xff]
        %v1116 = vld [vmem:[#allocation4 + $0x30] sm:$0xff]
        %v1117 = vld [vmem:[#allocation4 + $0x38] sm:$0xff]
        %v1119 = vperm.slane %v793, 0
        %v1120 = vperm.slane %v793, 1
        %v1123 = vmul.f32 %v1119, %v1110
        %v1124 = vmul.f32 %v1120, %v1111
        %v1125 = vmul.f32 %v1119, %v1112
        %v1126 = vmul.f32 %v1120, %v1113
        %v1127 = vmul.f32 %v1119, %v1114
        %v1128 = vmul.f32 %v1120, %v1115
        %v1129 = vmul.f32 %v1119, %v1116
        %v1130 = vmul.f32 %v1120, %v1117
        %v1135 = vunpack.c.l.b16 %v434
        %v1136 = vunpack.c.h.b16 %v434
        %v1137 = vunpack.c.l.b16 %v435
        %v1138 = vunpack.c.h.b16 %v435
        %v1139 = vunpack.c.l.b16 %v436
        %v1140 = vunpack.c.h.b16 %v436
        %v1141 = vunpack.c.l.b16 %v437
        %v1142 = vunpack.c.h.b16 %v437
        %v1143 = vpack.c.b16 %v1137, %v1135
        %v1144 = vpack.c.b16 %v1138, %v1136
        %v1145 = vpack.c.b16 %v1141, %v1139
        %v1146 = vpack.c.b16 %v1142, %v1140
        %1151 = vmatpush.bf16.msra.mxu0 %v1079
        %1152 = vmatpush.bf16.msra.mxu0 %v1077
        %1153 = vmatpush.bf16.msra.mxu0 %v1075
        %1154 = vmatpush.bf16.msra.mxu0 %v1073
        %1155 = vmatpush.bf16.msra.mxu0 %v1071
        %1156 = vmatpush.bf16.msra.mxu0 %v1069
        %1157 = vmatpush.bf16.msra.mxu0 %v1067
        %1158 = vmatpush.bf16.msra.mxu0 %v1065
        %1159 = vmatmul.bf16.gmra.mxu0 %v1143
        %v1160 = vpop.f32.mrf.mxu0
        %v1161 = vadd.f32 0.0, %v1160
        %v1162 = vpop.f32.mrf.mxu0
        %v1163 = vadd.f32 0.0, %v1162
        %1164 = vmatmul.bf16.gmra.mxu0 %v1145
        %v1165 = vpop.f32.mrf.mxu0
        %v1166 = vadd.f32 0.0, %v1165
        %v1167 = vpop.f32.mrf.mxu0
        %v1168 = vadd.f32 0.0, %v1167
        %1169 = vdwg.mxu0
        %1170 = vmatpush.bf16.msra.mxu0 %v1095
        %1171 = vmatpush.bf16.msra.mxu0 %v1093
        %1172 = vmatpush.bf16.msra.mxu0 %v1091
        %1173 = vmatpush.bf16.msra.mxu0 %v1089
        %1174 = vmatpush.bf16.msra.mxu0 %v1087
        %1175 = vmatpush.bf16.msra.mxu0 %v1085
        %1176 = vmatpush.bf16.msra.mxu0 %v1083
        %1177 = vmatpush.bf16.msra.mxu0 %v1081
        %1178 = vmatmul.bf16.gmra.mxu0 %v1144
        %v1179 = vpop.f32.mrf.mxu0
        %v1180 = vadd.f32 %v1161, %v1179
        %v1181 = vpop.f32.mrf.mxu0
        %v1182 = vadd.f32 %v1163, %v1181
        %1183 = vmatmul.bf16.gmra.mxu0 %v1146
        %v1184 = vpop.f32.mrf.mxu0
        %v1185 = vadd.f32 %v1166, %v1184
        %v1186 = vpop.f32.mrf.mxu0
        %v1187 = vadd.f32 %v1168, %v1186
        %1188 = vdwg.mxu0
        %1189 = vmatpush.bf16.msra.mxu0 %v1080
        %1190 = vmatpush.bf16.msra.mxu0 %v1078
        %1191 = vmatpush.bf16.msra.mxu0 %v1076
        %1192 = vmatpush.bf16.msra.mxu0 %v1074
        %1193 = vmatpush.bf16.msra.mxu0 %v1072
        %1194 = vmatpush.bf16.msra.mxu0 %v1070
        %1195 = vmatpush.bf16.msra.mxu0 %v1068
        %1196 = vmatpush.bf16.msra.mxu0 %v1066
        %1197 = vmatmul.bf16.gmra.mxu0 %v1143
        %v1198 = vpop.f32.mrf.mxu0
        %v1199 = vadd.f32 0.0, %v1198
        %v1200 = vpop.f32.mrf.mxu0
        %v1201 = vadd.f32 0.0, %v1200
        %1202 = vmatmul.bf16.gmra.mxu0 %v1145
        %v1203 = vpop.f32.mrf.mxu0
        %v1204 = vadd.f32 0.0, %v1203
        %v1205 = vpop.f32.mrf.mxu0
        %v1206 = vadd.f32 0.0, %v1205
        %1207 = vdwg.mxu0
        %1208 = vmatpush.bf16.msra.mxu0 %v1096
        %1209 = vmatpush.bf16.msra.mxu0 %v1094
        %1210 = vmatpush.bf16.msra.mxu0 %v1092
        %1211 = vmatpush.bf16.msra.mxu0 %v1090
        %1212 = vmatpush.bf16.msra.mxu0 %v1088
        %1213 = vmatpush.bf16.msra.mxu0 %v1086
        %1214 = vmatpush.bf16.msra.mxu0 %v1084
        %1215 = vmatpush.bf16.msra.mxu0 %v1082
        %1216 = vmatmul.bf16.gmra.mxu0 %v1144
        %v1217 = vpop.f32.mrf.mxu0
        %v1218 = vadd.f32 %v1199, %v1217
        %v1219 = vpop.f32.mrf.mxu0
        %v1220 = vadd.f32 %v1201, %v1219
        %1221 = vmatmul.bf16.gmra.mxu0 %v1146
        %v1222 = vpop.f32.mrf.mxu0
        %v1223 = vadd.f32 %v1204, %v1222
        %v1224 = vpop.f32.mrf.mxu0
        %v1225 = vadd.f32 %v1206, %v1224
        %1226 = vdwg.mxu0
        %v1227 = vadd.f32 %v1123, %v1180
        %v1228 = vadd.f32 %v1124, %v1218
        %v1229 = vadd.f32 %v1125, %v1182
        %v1230 = vadd.f32 %v1126, %v1220
        %v1231 = vadd.f32 %v1127, %v1185
        %v1232 = vadd.f32 %v1128, %v1223
        %v1233 = vadd.f32 %v1129, %v1187
        %v1234 = vadd.f32 %v1130, %v1225
        %1235 = vst [vmem:[#allocation4] sm:$0xff] %v1227
        %1236 = vst [vmem:[#allocation4 + $0x8] sm:$0xff] %v1228
        %1237 = vst [vmem:[#allocation4 + $0x10] sm:$0xff] %v1229
        %1238 = vst [vmem:[#allocation4 + $0x18] sm:$0xff] %v1230
        %1239 = vst [vmem:[#allocation4 + $0x20] sm:$0xff] %v1231
        %1240 = vst [vmem:[#allocation4 + $0x28] sm:$0xff] %v1232
        %1241 = vst [vmem:[#allocation4 + $0x30] sm:$0xff] %v1233
        %1242 = vst [vmem:[#allocation4 + $0x38] sm:$0xff] %v1234
        %1243 = vst.msk [vmem:[#allocation2] sm:$0x3] %vm1108, %v790
        // Predicated region
        $region61: #{tpu_custom_call.1} parent=39 // pred_check
          %p1244 = pneg %p412
        $region62: #{tpu_custom_call.1} parent=39 // pred_check_branch
          %1246 = sbr.rel (%p1244) target = $region64
        $region63: #{tpu_custom_call.1} parent=39 // pred_region
          %v1247 = vld [vmem:[#allocation3] sm:$0x3]
          %v1248 = vrcp.pop %v1247
          %v1249 = vmul.f32 %v1247, %v1248
          %v1250 = vsub.f32 1.0, %v1249
          %v1251 = vmul.f32 %v1248, %v1250
          %v1252 = vadd.f32 %v1248, %v1251
          %vm1253 = vweird.f32 %v1247
          %vm1254 = vweird.f32 %v1248
          %vm1255 = vmor %vm1253, %vm1254
          %v1256 = vsel %vm1255, %v1248, %v1252
          %v1257 = vand.u32 2147483647, %v1247
          %vm1258 = vcmp.eq.f32.partialorder %v1257, 8.507059e+37
          %v1259 = vand.u32 %v1247, 2147483648
          %v1260 = vor.u32 1.1754944e-38, %v1259
          %v1261 = vsel %vm1258, %v1260, %v1256
          %s1262 = sld [smem:[#allocation5]]
          %v1263 = vld [vmem:[#allocation4] sm:$0xff]
          %v1264 = vld [vmem:[#allocation4 + $0x8] sm:$0xff]
          %v1265 = vld [vmem:[#allocation4 + $0x10] sm:$0xff]
          %v1266 = vld [vmem:[#allocation4 + $0x18] sm:$0xff]
          %v1267 = vld [vmem:[#allocation4 + $0x20] sm:$0xff]
          %v1268 = vld [vmem:[#allocation4 + $0x28] sm:$0xff]
          %v1269 = vld [vmem:[#allocation4 + $0x30] sm:$0xff]
          %v1270 = vld [vmem:[#allocation4 + $0x38] sm:$0xff]
          %v1272 = vperm.slane %v1261, 0
          %v1273 = vperm.slane %v1261, 1
          %v1276 = vmul.f32 %v1263, %v1272
          %v1277 = vmul.f32 %v1264, %v1273
          %v1278 = vmul.f32 %v1265, %v1272
          %v1279 = vmul.f32 %v1266, %v1273
          %v1280 = vmul.f32 %v1267, %v1272
          %v1281 = vmul.f32 %v1268, %v1273
          %v1282 = vmul.f32 %v1269, %v1272
          %v1283 = vmul.f32 %v1270, %v1273
          %v1284 = vstv %s1262
          %v1285 = vmul.f32 %v1284, %v1276
          %v1286 = vmul.f32 %v1284, %v1277
          %v1287 = vmul.f32 %v1284, %v1278
          %v1288 = vmul.f32 %v1284, %v1279
          %v1289 = vmul.f32 %v1284, %v1280
          %v1290 = vmul.f32 %v1284, %v1281
          %v1291 = vmul.f32 %v1284, %v1282
          %v1292 = vmul.f32 %v1284, %v1283
          %v1293 = vld [vmem:[%s343] sm:$0xff]
          %v1294 = vld [vmem:[%s343 + $0x8] sm:$0xff]
          %v1295 = vld [vmem:[%s343 + $0x10] sm:$0xff]
          %v1296 = vld [vmem:[%s343 + $0x18] sm:$0xff]
          %v1297 = vld [vmem:[%s343 + $0x20] sm:$0xff]
          %v1298 = vld [vmem:[%s343 + $0x28] sm:$0xff]
          %v1299 = vld [vmem:[%s343 + $0x30] sm:$0xff]
          %v1300 = vld [vmem:[%s343 + $0x38] sm:$0xff]
          %v1301 = vadd.f32 %v1285, %v1293
          %v1302 = vadd.f32 %v1286, %v1294
          %v1303 = vadd.f32 %v1287, %v1295
          %v1304 = vadd.f32 %v1288, %v1296
          %v1305 = vadd.f32 %v1289, %v1297
          %v1306 = vadd.f32 %v1290, %v1298
          %v1307 = vadd.f32 %v1291, %v1299
          %v1308 = vadd.f32 %v1292, %v1300
          %1309 = vst [vmem:[%s405] sm:$0xff] %v1301
          %1310 = vst [vmem:[%s405 + $0x8] sm:$0xff] %v1302
          %1311 = vst [vmem:[%s405 + $0x10] sm:$0xff] %v1303
          %1312 = vst [vmem:[%s405 + $0x18] sm:$0xff] %v1304
          %1313 = vst [vmem:[%s405 + $0x20] sm:$0xff] %v1305
          %1314 = vst [vmem:[%s405 + $0x28] sm:$0xff] %v1306
          %1315 = vst [vmem:[%s405 + $0x30] sm:$0xff] %v1307
          %1316 = vst [vmem:[%s405 + $0x38] sm:$0xff] %v1308
        $region64: #{tpu_custom_call.1} parent=39 // pred_fallthru
          _
        %s1317 = sand.u32 %s191, 1
        %s1318 = scalar_lea.sflag [#allocation8], %s1317
        %s1319 = sand.u32 %s191, 1
        %s1320 = smul.addr %s1319, 64
        %s1321 = scalar_lea.vmem [#allocation14], %s1320
        // Predicated region
        $region65: #{tpu_custom_call.1} parent=39 // pred_check
          %p1322 = pneg %p201
        $region66: #{tpu_custom_call.1} parent=39 // pred_check_branch
          %1324 = sbr.rel (%p1322) target = $region68
        $region67: #{tpu_custom_call.1} parent=39 // pred_region
          %s1325 = smul.u32 2, %s35
          %1327 = vsyncadd %s1318, 0
          %s1328 = smul.addr %s34, 8
          %s1329 = sadd.s32 %s1325, %s1328
          %s1330 = smul.addr %s1329, 8
          %s1331 = scalar_lea.hbm %s5, %s1330
          %s1332 = sshll.u32 %s1321, 4
          %s1333 = int_to_ptr.vmem [resolvable:$true] %s1332
          %s1334 = sshll.u32 %s1331, 4
          %s1335 = int_to_ptr.hbm [resolvable:$true] %s1334
          %1340 = dma.vmem_to_hbm [thread:$0]  %s1333, 1024, %s1335, %s1318, 256, 256, 16
        $region68: #{tpu_custom_call.1} parent=39 // pred_fallthru
          _
      $region40: #{tpu_custom_call.1} parent=5 // pred_fallthru
        _
      %p1341 = scmp.le.s32.totalorder 2, %s24
      // Predicated region
      $region69: #{tpu_custom_call.1} parent=5 // pred_check
        %p1342 = pneg %p1341
      $region70: #{tpu_custom_call.1} parent=5 // pred_check_branch
        %1344 = sbr.rel (%p1342) target = $region72
      $region71: #{tpu_custom_call.1} parent=5 // pred_region
        %s1345 = ssub.s32 %s24, 2
        // Predicated region
        $region73: #{tpu_custom_call.1} parent=71 // pred_check
          %p1346 = pneg %p207
        $region74: #{tpu_custom_call.1} parent=71 // pred_check_branch
          %1348 = sbr.rel (%p1346) target = $region76
        $region75: #{tpu_custom_call.1} parent=71 // pred_region
          %s1349 = sand.u32 %s192, 1
          %s1350 = scalar_lea.sflag [#allocation8], %s1349
          %s1351 = sand.u32 %s192, 1
          %s1352 = smul.addr %s1351, 64
          %s1353 = scalar_lea.vmem [#allocation14], %s1352
          %1355 = dma.done %s1350, 1024
        $region76: #{tpu_custom_call.1} parent=71 // pred_fallthru
          _
      $region72: #{tpu_custom_call.1} parent=5 // pred_fallthru
        _
    $region6: #{tpu_custom_call.1} parent=1 // loop_footer
      %s28 = sadd.s32 1, %s24
    $region7: #{tpu_custom_call.1} parent=1 // loop_footer_branch
      %23 = sbr.rel target = $region3
    $region8: #{tpu_custom_call.1} parent=1 // loop_exit
      _
    %1356 = vsyncpa [#allocation7], 1
    %s1357 = scalar_lea.sflag [#allocation7], 1
    %1358 = vsyncpa %s1357, 1
    %1359 = vsyncpa [#allocation10], 1
    %s1360 = scalar_lea.sflag [#allocation10], 1
    %1361 = vsyncpa %s1360, 1
    %1362 = vsyncpa [#allocation13], 1
    %s1363 = scalar_lea.sflag [#allocation13], 1
    %1364 = vsyncpa %s1363, 1
    %1365 = vsyncpa [#allocation8], 1
    %s1366 = scalar_lea.sflag [#allocation8], 1
    %1367 = vsyncpa %s1366, 1

</llo_original>
